<compile_context>
chip_gen: v7x
topology: tpu7x:2x2x1
jax: 0.10.0
libtpu: 0.0.40
codegen_flags: <defaults>
</compile_context>

<pallas_src>
import functools
import math

import jax
import jax.numpy as jnp
from jax.experimental import pallas as pl
from jax.experimental.pallas import tpu as pltpu


def _round_up(v, m):
    return ((v + m - 1) // m) * m


def _vmem_capacity_bytes():
    try:
        return int(pltpu.get_tpu_info().vmem_capacity_bytes)
    except Exception:
        return 64 * 1024 * 1024  # conservative fallback (v7x per-core VMEM)


# ----------------------------------------------------------------------------
# Kernels
# ----------------------------------------------------------------------------
def _liquid_fused_kernel(adapt_ref, x_ref, wbt_ref, wat_ref, bb_ref, o_ref, *,
                         adapt_dim):
    """grid = (B tiles, OUT tiles, IN tiles); IN (last axis) is the reduction."""
    k = pl.program_id(2)

    # Combined weight tile (tk, tn) in (IN, OUT) orientation, built on the VPU.
    # adapt_dim is small and static -> fully unrolled scalar-broadcast FMAs.
    w = wbt_ref[...].astype(jnp.float32)
    for a in range(adapt_dim):
        w = w + adapt_ref[0, a] * wat_ref[a].astype(jnp.float32)

    partial = jnp.dot(x_ref[...], w, preferred_element_type=jnp.float32)

    # Accumulate directly into the k-invariant f32 out tile (no scratch).
    @pl.when(k == 0)
    def _init():
        o_ref[...] = partial + bb_ref[...]

    @pl.when(k != 0)
    def _accum():
        o_ref[...] += partial


def _build_weight_kernel(adapt_ref, wbt_ref, wat_ref, w_ref, *, adapt_dim):
    """Elementwise: W = wbt(+ba) + sum_a adapt[a] * wat[a], per (IN,OUT) tile."""
    w = wbt_ref[...].astype(jnp.float32)
    for a in range(adapt_dim):
        w = w + adapt_ref[0, a] * wat_ref[a].astype(jnp.float32)
    w_ref[...] = w


def _matmul_bias_kernel(x_ref, w_ref, bb_ref, o_ref):
    """Plain tiled y = x @ W + b with accumulation in the f32 out tile."""
    k = pl.program_id(2)
    partial = jnp.dot(x_ref[...], w_ref[...], preferred_element_type=jnp.float32)

    @pl.when(k == 0)
    def _init():
        o_ref[...] = partial + bb_ref[...]

    @pl.when(k != 0)
    def _accum():
        o_ref[...] += partial


# ----------------------------------------------------------------------------
# VMEM-aware tile fitting (full double-buffered footprint, not just wat slab)
# ----------------------------------------------------------------------------
def _fit_tiles(tm, tn, tk, adapt_dim, w_itemsize, budget_bytes):
    def footprint(tm_, tn_, tk_):
        x_b = tm_ * tk_ * 4 * 2                               # x tile (dbl buf)
        w_b = (adapt_dim + 1) * tk_ * tn_ * w_itemsize * 2    # wbt + wat slab
        o_b = tm_ * tn_ * 4 * 2                               # out tile
        b_b = tn_ * 4 * 2                                     # bias tile
        return x_b + w_b + o_b + b_b

    while footprint(tm, tn, tk) > budget_bytes:
        if tk >= tn and tk > 128:
            tk = max(128, _round_up(tk // 2, 128))
        elif tn > 128:
            tn = max(128, _round_up(tn // 2, 128))
        elif tm > 8:
            tm = max(8, _round_up(tm // 2, 8))
        else:
            break
    return tm, tn, tk


# ----------------------------------------------------------------------------
# Wrapper
# ----------------------------------------------------------------------------
def liquid_linear(x, adapt_input, wbt, bb, wat, *,
                  tile_m=256, tile_n=512, tile_k=1024,
                  vmem_limit_bytes=None, two_stage=None):
    """LiquidLinear forward.

    x           : (..., IN)
    adapt_input : (A,)
    wbt         : (IN, OUT)   = base_linear.weight.T + adapt_linear.bias.view(OUT,IN).T
    bb          : (OUT,)      = base_linear.bias
    wat         : (A, IN, OUT), wat[a,i,o] = adapt_linear.weight[o*IN+i, a]
    returns     : (..., OUT)  float32
    """
    lead = x.shape[:-1]
    IN = x.shape[-1]
    x2 = x.reshape(-1, IN)
    B = x2.shape[0]
    INw, OUT = wbt.shape
    A = adapt_input.shape[-1]
    assert INw == IN and wat.shape == (A, IN, OUT) and bb.shape == (OUT,)
    w_itemsize = jnp.dtype(wat.dtype).itemsize

    # Generation-aware VMEM budget (v5e/v6e: 128 MiB, v7x: 64 MiB per core).
    cap = _vmem_capacity_bytes()
    if vmem_limit_bytes is None:
        vmem_limit_bytes = min(cap, 128 * 1024 * 1024) - 16 * 1024 * 1024
    tile_budget = int(vmem_limit_bytes * 0.85)

    # Tile selection.
    tm = min(tile_m, _round_up(B, 8))       # sublane-aligned batch tile
    tn = min(tile_n, _round_up(OUT, 128))   # lane-dense output tile
    tk = min(tile_k, _round_up(IN, 128))
    tm, tn, tk = _fit_tiles(tm, tn, tk, A, w_itemsize, tile_budget)

    Bp, OUTp, INp = _round_up(B, tm), _round_up(OUT, tn), _round_up(IN, tk)
    n_b_tiles = Bp // tm

    if two_stage is None:
        # Multiple B tiles would replay the (A+1)-wide weight stream per tile:
        # build the combined weight once and run a plain matmul instead.
        two_stage = n_b_tiles > 1

    if not two_stage:
        # Megacore (v7x has 2 TCs): ensure >= 2 blocks on a parallel axis.
        if (Bp // tm) * (OUTp // tn) == 1:
            if OUTp >= 256:
                tn = max(128, _round_up(tn // 2, 128))
            elif Bp >= 16:
                tm = max(8, _round_up(tm // 2, 8))
            Bp, OUTp = _round_up(B, tm), _round_up(OUT, tn)

    # Zero-pad to tile multiples (no-ops for aligned shapes).
    if (Bp, INp) != (B, IN):
        x2 = jnp.pad(x2, ((0, Bp - B), (0, INp - IN)))
    if (INp, OUTp) != (IN, OUT):
        wbt = jnp.pad(wbt, ((0, INp - IN), (0, OUTp - OUT)))
        wat = jnp.pad(wat, ((0, 0), (0, INp - IN), (0, OUTp - OUT)))
    if OUTp != OUT:
        bb = jnp.pad(bb, (0, OUTp - OUT))

    adapt2 = adapt_input.reshape(1, A).astype(jnp.float32)   # tiny -> SMEM
    bb2 = bb.reshape(1, OUTp).astype(jnp.float32)

    cparams3 = pltpu.CompilerParams(
        dimension_semantics=("parallel", "parallel", "arbitrary"),
        vmem_limit_bytes=vmem_limit_bytes)

    if not two_stage:
        # --- fully fused single launch: weight delta built per tile ----------
        grid = (Bp // tm, OUTp // tn, INp // tk)
        y = pl.pallas_call(
            functools.partial(_liquid_fused_kernel, adapt_dim=A),
            out_shape=jax.ShapeDtypeStruct((Bp, OUTp), jnp.float32),
            grid_spec=pltpu.PrefetchScalarGridSpec(
                num_scalar_prefetch=0,
                grid=grid,
                in_specs=[
                    pl.BlockSpec(memory_space=pltpu.MemorySpace.SMEM),     # adapt (1,A)
                    pl.BlockSpec((tm, tk), lambda i, j, k: (i, k)),        # x
                    pl.BlockSpec((tk, tn), lambda i, j, k: (k, j)),        # wbt(+ba)
                    pl.BlockSpec((A, tk, tn), lambda i, j, k: (0, k, j)),  # wat
                    pl.BlockSpec((1, tn), lambda i, j, k: (0, j)),         # bb
                ],
                out_specs=pl.BlockSpec((tm, tn), lambda i, j, k: (i, j)),
            ),
            compiler_params=cparams3,
        )(adapt2, x2, wbt, wat, bb2)
    else:
        # --- stage 1: build combined weight W once (elementwise) -------------
        grid_w = (INp // tk, OUTp // tn)
        w_full = pl.pallas_call(
            functools.partial(_build_weight_kernel, adapt_dim=A),
            out_shape=jax.ShapeDtypeStruct((INp, OUTp), jnp.float32),
            grid_spec=pltpu.PrefetchScalarGridSpec(
                num_scalar_prefetch=0,
                grid=grid_w,
                in_specs=[
                    pl.BlockSpec(memory_space=pltpu.MemorySpace.SMEM),   # adapt
                    pl.BlockSpec((tk, tn), lambda i, j: (i, j)),         # wbt(+ba)
                    pl.BlockSpec((A, tk, tn), lambda i, j: (0, i, j)),   # wat
                ],
                out_specs=pl.BlockSpec((tk, tn), lambda i, j: (i, j)),
            ),
            compiler_params=pltpu.CompilerParams(
                dimension_semantics=("parallel", "parallel"),
                vmem_limit_bytes=vmem_limit_bytes),
        )(adapt2, wbt, wat)

        # --- stage 2: plain tiled matmul y = x @ W + b ------------------------
        grid = (Bp // tm, OUTp // tn, INp // tk)
        y = pl.pallas_call(
            _matmul_bias_kernel,
            out_shape=jax.ShapeDtypeStruct((Bp, OUTp), jnp.float32),
            grid_spec=pltpu.PrefetchScalarGridSpec(
                num_scalar_prefetch=0,
                grid=grid,
                in_specs=[
                    pl.BlockSpec((tm, tk), lambda i, j, k: (i, k)),   # x
                    pl.BlockSpec((tk, tn), lambda i, j, k: (k, j)),   # W
                    pl.BlockSpec((1, tn), lambda i, j, k: (0, j)),    # bb
                ],
                out_specs=pl.BlockSpec((tm, tn), lambda i, j, k: (i, j)),
            ),
            compiler_params=cparams3,
        )(x2, w_full, bb2)

    if (Bp, OUTp) != (B, OUT):
        y = y[:B, :OUT]
    return y.reshape(*lead, OUT)


# ----------------------------------------------------------------------------
# Deterministic parameter init in PyTorch layout (xavier weights, zero biases)
# plus the ONE-TIME relayout into the kernel-friendly layout.
# ----------------------------------------------------------------------------
def _xavier_uniform(key, shape):
    fan_out, fan_in = shape
    bound = math.sqrt(6.0 / (fan_in + fan_out))
    return jax.random.uniform(key, shape, jnp.float32, -bound, bound)


def init_liquid_linear(key, in_features, out_features, adapt_dim):
    k1, k2 = jax.random.split(key)
    wb = _xavier_uniform(k1, (out_features, in_features))               # base_linear.weight
    bb = jnp.zeros((out_features,), jnp.float32)                        # base_linear.bias
    wa = _xavier_uniform(k2, (out_features * in_features, adapt_dim))   # adapt_linear.weight
    ba = jnp.zeros((out_features * in_features,), jnp.float32)          # adapt_linear.bias
    return wb, bb, wa, ba


def to_kernel_layout(wb, wa, ba, weight_dtype=jnp.float32):
    """One-time relayout (not per forward call).

    wbt: (IN, OUT) = wb.T with adapt_linear.bias folded in (ba.view(OUT,IN).T).
    wat: (A, IN, OUT), wat[a,i,o] = wa[o*IN+i, a].
    weight_dtype=bf16 halves the dominant HBM weight stream (f32 upcast
    happens inside the kernel).
    """
    OUT, IN = wb.shape
    A = wa.shape[1]
    wbt = (wb.T + ba.reshape(OUT, IN).T).astype(weight_dtype)
    wat = wa.reshape(OUT, IN, A).transpose(2, 1, 0).astype(weight_dtype)
    return wbt, wat


# ----------------------------------------------------------------------------
# Pure-JAX reference using the exact PyTorch formulation (for verification).
# ----------------------------------------------------------------------------
def liquid_linear_ref(x, adapt_input, wb, bb, wa, ba):
    hp = jax.lax.Precision.HIGHEST
    aw = (jnp.dot(adapt_input, wa.T, precision=hp) + ba).reshape(wb.shape)
    w = wb + aw
    return jnp.dot(x, w.T, precision=hp) + bb


if __name__ == "__main__":
    B, IN, OUT, A = 16, 512, 256, 8

    key = jax.random.PRNGKey(0)
    kp, kx, ka = jax.random.split(key, 3)

    wb, bb, wa, ba = init_liquid_linear(kp, IN, OUT, A)
    wbt, wat = to_kernel_layout(wb, wa, ba)                      # f32 layout
    wbt16, wat16 = to_kernel_layout(wb, wa, ba, jnp.bfloat16)    # bf16 weights

    x = jax.random.normal(kx, (B, IN), jnp.float32)
    adapt_input = jax.random.normal(ka, (A,), jnp.float32)

    y_ref = liquid_linear_ref(x, adapt_input, wb, bb, wa, ba)

    # 1) Default generation-aware tiling -> fused single-launch path.
    y = jax.block_until_ready(liquid_linear(x, adapt_input, wbt, bb, wat))
    assert y.shape == (B, OUT)
    assert jnp.allclose(y, y_ref, atol=1e-3, rtol=1e-3), "fused default mismatch"

    # 2) Small IN tile -> exercises multi-step reduction / in-out accumulation.
    y2 = jax.block_until_ready(
        liquid_linear(x, adapt_input, wbt, bb, wat,
                      tile_m=16, tile_n=128, tile_k=128))
    assert jnp.allclose(y2, y_ref, atol=1e-3, rtol=1e-3), "fused tiled mismatch"

    # 3) Multiple B tiles -> two-stage path (build W once + plain matmul).
    y3 = jax.block_until_ready(
        liquid_linear(x, adapt_input, wbt, bb, wat,
                      tile_m=8, tile_n=128, tile_k=128))
    assert jnp.allclose(y3, y_ref, atol=1e-3, rtol=1e-3), "two-stage mismatch"

    # 4) bf16-stored weights (halved HBM weight stream), looser tolerance.
    y4 = jax.block_until_ready(liquid_linear(x, adapt_input, wbt16, bb, wat16))
    assert jnp.allclose(y4, y_ref, atol=3e-2, rtol=3e-2), "bf16 weights mismatch"

    print("KERNEL_OK")
</pallas_src>

<mosaic_0001>
module attributes {stable_mosaic.version = 11 : i64} {
  func.func @_liquid_fused_kernel(%arg0: i32, %arg1: i32, %arg2: i32, %arg3: memref<1x8xf32, #tpu.memory_space<smem>>, %arg4: memref<16x512xf32, #tpu.memory_space<vmem>>, %arg5: memref<512x128xf32, #tpu.memory_space<vmem>>, %arg6: memref<8x512x128xf32, #tpu.memory_space<vmem>>, %arg7: memref<1x128xf32, #tpu.memory_space<vmem>>, %arg8: memref<16x128xf32, #tpu.memory_space<vmem>>) attributes {dimension_semantics = [#tpu.dimension_semantics<parallel>, #tpu.dimension_semantics<parallel>, #tpu.dimension_semantics<arbitrary>], iteration_bounds = array<i64: 1, 2, 1>, scalar_prefetch = 0 : i64, scratch_operands = 0 : i64, tpu.core_type = #tpu.core_type<tc>, window_params = [{transform_indices = @transform_0, window_bounds = array<i64: 1, 8>}, {transform_indices = @transform_1, window_bounds = array<i64: 16, 512>}, {transform_indices = @transform_2, window_bounds = array<i64: 512, 128>}, {transform_indices = @transform_3, window_bounds = array<i64: 8, 512, 128>}, {transform_indices = @transform_4, window_bounds = array<i64: 1, 128>}, {transform_indices = @transform_5, window_bounds = array<i64: 16, 128>}]} {
    %c0 = arith.constant 0 : index
    %c0_0 = arith.constant 0 : index
    %0 = vector.load %arg5[%c0, %c0_0] : memref<512x128xf32, #tpu.memory_space<vmem>>, vector<512x128xf32>
    %c0_1 = arith.constant 0 : index
    %c0_2 = arith.constant 0 : index
    %1 = memref.load %arg3[%c0_1, %c0_2] : memref<1x8xf32, #tpu.memory_space<smem>>
    %c0_3 = arith.constant 0 : index
    %c0_4 = arith.constant 0 : index
    %c0_5 = arith.constant 0 : index
    %2 = vector.load %arg6[%c0_3, %c0_4, %c0_5] : memref<8x512x128xf32, #tpu.memory_space<vmem>>, vector<1x512x128xf32>
    %3 = vector.shape_cast %2 : vector<1x512x128xf32> to vector<512x128xf32>
    %4 = vector.broadcast %1 : f32 to vector<512x128xf32>
    %5 = arith.mulf %4, %3 : vector<512x128xf32>
    %6 = arith.addf %0, %5 : vector<512x128xf32>
    %c0_6 = arith.constant 0 : index
    %c1 = arith.constant 1 : index
    %7 = memref.load %arg3[%c0_6, %c1] : memref<1x8xf32, #tpu.memory_space<smem>>
    %c1_7 = arith.constant 1 : index
    %c0_8 = arith.constant 0 : index
    %c0_9 = arith.constant 0 : index
    %8 = vector.load %arg6[%c1_7, %c0_8, %c0_9] : memref<8x512x128xf32, #tpu.memory_space<vmem>>, vector<1x512x128xf32>
    %9 = vector.shape_cast %8 : vector<1x512x128xf32> to vector<512x128xf32>
    %10 = vector.broadcast %7 : f32 to vector<512x128xf32>
    %11 = arith.mulf %10, %9 : vector<512x128xf32>
    %12 = arith.addf %6, %11 : vector<512x128xf32>
    %c0_10 = arith.constant 0 : index
    %c2 = arith.constant 2 : index
    %13 = memref.load %arg3[%c0_10, %c2] : memref<1x8xf32, #tpu.memory_space<smem>>
    %c2_11 = arith.constant 2 : index
    %c0_12 = arith.constant 0 : index
    %c0_13 = arith.constant 0 : index
    %14 = vector.load %arg6[%c2_11, %c0_12, %c0_13] : memref<8x512x128xf32, #tpu.memory_space<vmem>>, vector<1x512x128xf32>
    %15 = vector.shape_cast %14 : vector<1x512x128xf32> to vector<512x128xf32>
    %16 = vector.broadcast %13 : f32 to vector<512x128xf32>
    %17 = arith.mulf %16, %15 : vector<512x128xf32>
    %18 = arith.addf %12, %17 : vector<512x128xf32>
    %c0_14 = arith.constant 0 : index
    %c3 = arith.constant 3 : index
    %19 = memref.load %arg3[%c0_14, %c3] : memref<1x8xf32, #tpu.memory_space<smem>>
    %c3_15 = arith.constant 3 : index
    %c0_16 = arith.constant 0 : index
    %c0_17 = arith.constant 0 : index
    %20 = vector.load %arg6[%c3_15, %c0_16, %c0_17] : memref<8x512x128xf32, #tpu.memory_space<vmem>>, vector<1x512x128xf32>
    %21 = vector.shape_cast %20 : vector<1x512x128xf32> to vector<512x128xf32>
    %22 = vector.broadcast %19 : f32 to vector<512x128xf32>
    %23 = arith.mulf %22, %21 : vector<512x128xf32>
    %24 = arith.addf %18, %23 : vector<512x128xf32>
    %c0_18 = arith.constant 0 : index
    %c4 = arith.constant 4 : index
    %25 = memref.load %arg3[%c0_18, %c4] : memref<1x8xf32, #tpu.memory_space<smem>>
    %c4_19 = arith.constant 4 : index
    %c0_20 = arith.constant 0 : index
    %c0_21 = arith.constant 0 : index
    %26 = vector.load %arg6[%c4_19, %c0_20, %c0_21] : memref<8x512x128xf32, #tpu.memory_space<vmem>>, vector<1x512x128xf32>
    %27 = vector.shape_cast %26 : vector<1x512x128xf32> to vector<512x128xf32>
    %28 = vector.broadcast %25 : f32 to vector<512x128xf32>
    %29 = arith.mulf %28, %27 : vector<512x128xf32>
    %30 = arith.addf %24, %29 : vector<512x128xf32>
    %c0_22 = arith.constant 0 : index
    %c5 = arith.constant 5 : index
    %31 = memref.load %arg3[%c0_22, %c5] : memref<1x8xf32, #tpu.memory_space<smem>>
    %c5_23 = arith.constant 5 : index
    %c0_24 = arith.constant 0 : index
    %c0_25 = arith.constant 0 : index
    %32 = vector.load %arg6[%c5_23, %c0_24, %c0_25] : memref<8x512x128xf32, #tpu.memory_space<vmem>>, vector<1x512x128xf32>
    %33 = vector.shape_cast %32 : vector<1x512x128xf32> to vector<512x128xf32>
    %34 = vector.broadcast %31 : f32 to vector<512x128xf32>
    %35 = arith.mulf %34, %33 : vector<512x128xf32>
    %36 = arith.addf %30, %35 : vector<512x128xf32>
    %c0_26 = arith.constant 0 : index
    %c6 = arith.constant 6 : index
    %37 = memref.load %arg3[%c0_26, %c6] : memref<1x8xf32, #tpu.memory_space<smem>>
    %c6_27 = arith.constant 6 : index
    %c0_28 = arith.constant 0 : index
    %c0_29 = arith.constant 0 : index
    %38 = vector.load %arg6[%c6_27, %c0_28, %c0_29] : memref<8x512x128xf32, #tpu.memory_space<vmem>>, vector<1x512x128xf32>
    %39 = vector.shape_cast %38 : vector<1x512x128xf32> to vector<512x128xf32>
    %40 = vector.broadcast %37 : f32 to vector<512x128xf32>
    %41 = arith.mulf %40, %39 : vector<512x128xf32>
    %42 = arith.addf %36, %41 : vector<512x128xf32>
    %c0_30 = arith.constant 0 : index
    %c7 = arith.constant 7 : index
    %43 = memref.load %arg3[%c0_30, %c7] : memref<1x8xf32, #tpu.memory_space<smem>>
    %c7_31 = arith.constant 7 : index
    %c0_32 = arith.constant 0 : index
    %c0_33 = arith.constant 0 : index
    %44 = vector.load %arg6[%c7_31, %c0_32, %c0_33] : memref<8x512x128xf32, #tpu.memory_space<vmem>>, vector<1x512x128xf32>
    %45 = vector.shape_cast %44 : vector<1x512x128xf32> to vector<512x128xf32>
    %46 = vector.broadcast %43 : f32 to vector<512x128xf32>
    %47 = arith.mulf %46, %45 : vector<512x128xf32>
    %48 = arith.addf %42, %47 : vector<512x128xf32>
    %c0_34 = arith.constant 0 : index
    %c0_35 = arith.constant 0 : index
    %49 = vector.load %arg4[%c0_34, %c0_35] : memref<16x512xf32, #tpu.memory_space<vmem>>, vector<16x512xf32>
    %cst = arith.constant dense<0.000000e+00> : vector<16x128xf32>
    %50 = tpu.matmul %49, %48, %cst {dimension_numbers = #tpu.dot_dimension_numbers<[1], [0], [0], [1], [0, 0, 1, 1], [], []>} : vector<16x512xf32>, vector<512x128xf32>, vector<16x128xf32> -> vector<16x128xf32>
    %c0_i32 = arith.constant 0 : i32
    %51 = arith.cmpi eq, %arg2, %c0_i32 : i32
    %52 = arith.extui %51 : i1 to i32
    %c0_i32_36 = arith.constant 0 : i32
    %53 = arith.cmpi ne, %52, %c0_i32_36 : i32
    scf.if %53 {
      %c0_39 = arith.constant 0 : index
      %c0_40 = arith.constant 0 : index
      %57 = vector.load %arg7[%c0_39, %c0_40] : memref<1x128xf32, #tpu.memory_space<vmem>>, vector<1x128xf32>
      %58 = vector.broadcast %57 : vector<1x128xf32> to vector<16x128xf32>
      %59 = arith.addf %50, %58 : vector<16x128xf32>
      %c0_41 = arith.constant 0 : index
      %c0_42 = arith.constant 0 : index
      %60 = vector.load %arg8[%c0_41, %c0_42] : memref<16x128xf32, #tpu.memory_space<vmem>>, vector<16x128xf32>
      tpu.vector_store %arg8[%c0_41, %c0_42], %59 {strides = array<i32>} : memref<16x128xf32, #tpu.memory_space<vmem>>, vector<16x128xf32>,
    } else {
    }
    %c0_i32_37 = arith.constant 0 : i32
    %54 = arith.cmpi ne, %arg2, %c0_i32_37 : i32
    %55 = arith.extui %54 : i1 to i32
    %c0_i32_38 = arith.constant 0 : i32
    %56 = arith.cmpi ne, %55, %c0_i32_38 : i32
    scf.if %56 {
      %c0_39 = arith.constant 0 : index
      %c0_40 = arith.constant 0 : index
      %57 = vector.load %arg8[%c0_39, %c0_40] : memref<16x128xf32, #tpu.memory_space<vmem>>, vector<16x128xf32>
      %58 = arith.addf %57, %50 : vector<16x128xf32>
      %c0_41 = arith.constant 0 : index
      %c0_42 = arith.constant 0 : index
      %59 = vector.load %arg8[%c0_41, %c0_42] : memref<16x128xf32, #tpu.memory_space<vmem>>, vector<16x128xf32>
      tpu.vector_store %arg8[%c0_41, %c0_42], %58 {strides = array<i32>} : memref<16x128xf32, #tpu.memory_space<vmem>>, vector<16x128xf32>,
    } else {
    }
    return
  }
  func.func @transform_0(%arg0: i32, %arg1: i32, %arg2: i32) -> (i32, i32) {
    %c0_i32 = arith.constant 0 : i32
    %c0_i32_0 = arith.constant 0 : i32
    %c0_i32_1 = arith.constant 0 : i32
    return %c0_i32, %c0_i32_0 : i32, i32
  }
  func.func @transform_1(%arg0: i32, %arg1: i32, %arg2: i32) -> (i32, i32) {
    %c0_i32 = arith.constant 0 : i32
    return %arg0, %arg2 : i32, i32
  }
  func.func @transform_2(%arg0: i32, %arg1: i32, %arg2: i32) -> (i32, i32) {
    %c0_i32 = arith.constant 0 : i32
    return %arg2, %arg1 : i32, i32
  }
  func.func @transform_3(%arg0: i32, %arg1: i32, %arg2: i32) -> (i32, i32, i32) {
    %c0_i32 = arith.constant 0 : i32
    %c0_i32_0 = arith.constant 0 : i32
    return %c0_i32, %arg2, %arg1 : i32, i32, i32
  }
  func.func @transform_4(%arg0: i32, %arg1: i32, %arg2: i32) -> (i32, i32) {
    %c0_i32 = arith.constant 0 : i32
    %c0_i32_0 = arith.constant 0 : i32
    return %c0_i32, %arg1 : i32, i32
  }
  func.func @transform_5(%arg0: i32, %arg1: i32, %arg2: i32) -> (i32, i32) {
    %c0_i32 = arith.constant 0 : i32
    return %arg0, %arg1 : i32, i32
  }
}

</mosaic_0001>

<llo_original>
// kernel: tpu_custom_call.1
$region0: #{tpu_custom_call.1}
  #allocation0 [shape = 'u32[]', space=smem, size = 0x4, offset = 0x4, fixed_abs, tag = 'smem constant byte address 0x4 - core index']
  #allocation1 [shape = 'u32[144,128]{1,0:T(1,128)}', space=vmem, size = 0x12000, scoped, tag = 'internal scratch']
  %s0 = inlined_call_operand.hbm [shape: f32[1,8], index: 0, kind: input, shape index: {}]
  %s1 = inlined_call_operand.hbm [shape: f32[16,512], index: 1, kind: input, shape index: {}]
  %s2 = inlined_call_operand.hbm [shape: f32[512,256], index: 2, kind: input, shape index: {}]
  %s3 = inlined_call_operand.hbm [shape: f32[8,512,256], index: 3, kind: input, shape index: {}]
  %s4 = inlined_call_operand.hbm [shape: f32[1,256], index: 4, kind: input, shape index: {}]
  %s5 = inlined_call_operand.hbm [shape: f32[16,256], index: 5, kind: output, shape index: {}]
  %s6 = sld [smem:[#allocation0]]
  $region81: #{tpu_custom_call.1} parent=0
    _
  %s8 = ssub.s32 1, %s6
  %s9 = scalar_select 0, %s8, %s6
  $region1: #{tpu_custom_call.1} parent=0
    #allocation2 [shape = 'u8[512]{0}', space=smem, size = 0x200, scoped, tag = 'input window, operand 0, single buffered']
    #allocation3 [shape = 's32[2]{0}', space=sflag, size = 0x8, scoped, tag = 'scoped memory for tpu_custom_call.1']
    #allocation4 [shape = 's32[2]{0}', space=sflag, size = 0x8, scoped, tag = 'scoped memory for tpu_custom_call.1']
    #allocation5 [shape = 's32[2]{0}', space=sflag, size = 0x8, scoped, tag = 'scoped memory for tpu_custom_call.1']
    #allocation6 [shape = 'u8[32768]{0}', space=vmem, size = 0x8000, scoped, tag = 'input window, operand 1, single buffered']
    #allocation7 [shape = 'u8[524288]{0}', space=vmem, size = 0x80000, scoped, tag = 'input window, operand 2']
    #allocation8 [shape = 's32[2]{0}', space=sflag, size = 0x8, scoped, tag = 'scoped memory for tpu_custom_call.1']
    #allocation9 [shape = 'u8[4194304]{0}', space=vmem, size = 0x400000, scoped, tag = 'input window, operand 3']
    #allocation10 [shape = 'u8[1024]{0}', space=vmem, size = 0x400, scoped, tag = 'input window, operand 4']
    #allocation11 [shape = 's32[2]{0}', space=sflag, size = 0x8, scoped, tag = 'scoped memory for tpu_custom_call.1']
    #allocation12 [shape = 'u8[16384]{0}', space=vmem, size = 0x4000, scoped, tag = 'output window, operand 0']
    %10 = vsyncpa [#allocation5], 0
    %11 = vsyncpa [#allocation3], 0
    %12 = vsyncpa [#allocation8], 0
    %s13 = scalar_lea.sflag [#allocation8], 1
    %14 = vsyncpa %s13, 0
    %15 = vsyncpa [#allocation11], 0
    %s16 = scalar_lea.sflag [#allocation11], 1
    %17 = vsyncpa %s16, 0
    %18 = vsyncpa [#allocation4], 0
    %s19 = scalar_lea.sflag [#allocation4], 1
    %20 = vsyncpa %s19, 0
    loop: start=0, step=1, limit=4
    $region2: #{tpu_custom_call.1} parent=1 // loop_pre_header
      _
    $region3: #{tpu_custom_call.1} parent=1 // loop_header
      %s22 = sphi 0, %s26
      %p23 = scmp.ge.s32.totalorder %s22, 4
      %s29 = sphi 0, %s48
      %s30 = sphi 0, %s44
      %s31 = sphi 0, %s40
      %s32 = sphi 0, %s29
      %s33 = sphi 0, %s30
      %s34 = sphi 0, %s31
      %s35 = sphi 0, %s32
      %s36 = sphi 0, %s33
      %s37 = sphi 0, %s34
      %s49 = sphi 0, %s49
      %s51 = sphi 0, %s49
      %s52 = sphi 0, %s51
      %s66 = sphi 0, %s52
      %s74 = sphi 0, %s76
      %s77 = sphi 0, %s74
      %s78 = sphi 0, %s77
      %s94 = sphi 0, %s78
      %s102 = sphi 0, %s104
      %s105 = sphi 0, %s102
      %s106 = sphi 0, %s105
      %s122 = sphi 0, %s106
      %s130 = sphi 0, %s132
      %s133 = sphi 0, %s130
      %s134 = sphi 0, %s133
      %s150 = sphi 0, %s134
      %s156 = sphi 0, %s158
      %s159 = sphi 0, %s156
      %s160 = sphi 0, %s159
      %s176 = sphi 0, %s160
      %s184 = sphi 0, %s186
      %s187 = sphi 0, %s184
      %s188 = sphi 0, %s187
      %s204 = sphi 0, %s188
    $region4: #{tpu_custom_call.1} parent=1 // loop_header_branch
      %25 = sbr.rel (%p23) target = $region8
    $region5: #{tpu_custom_call.1} parent=1 // loop_body
      %s27 = ssub.s32 %s22, 1
      %s28 = ssub.s32 %s22, 2
      %s38 = sadd.s32 1, %s31
      %p39 = scmp.ge.s32.totalorder %s38, 1
      %s40 = scalar_select %p39, 0, %s38
      %s41 = sadd.s32 1, %s30
      %s42 = scalar_select %p39, %s41, %s30
      %p43 = scmp.ge.s32.totalorder %s42, 2
      %s44 = scalar_select %p43, 0, %s42
      %s45 = sadd.s32 1, %s29
      %s46 = scalar_select %p43, %s45, %s29
      %p47 = scmp.ge.s32.totalorder %s46, 1
      %s48 = scalar_select %p47, 0, %s46
      %s50 = sadd.s32 %s49, 1
      %p53 = scmp.eq.s32.totalorder %s22, 1
      %p54 = scmp.ne.s32.totalorder %s49, %s51
      %p55 = scmp.eq.s32.totalorder %s22, 0
      %p56 = por %p54, %p55
      %p57 = scmp.ne.s32.totalorder %s49, %s51
      %p58 = scmp.eq.s32.totalorder %s27, 1
      %p59 = por %p57, %p58
      %p60 = scmp.ne.s32.totalorder %s51, %s52
      %p61 = scmp.eq.s32.totalorder %s27, 0
      %p62 = por %p60, %p61
      %p63 = scmp.ne.s32.totalorder %s51, %s52
      %p64 = scmp.eq.s32.totalorder %s28, 1
      %p65 = por %p63, %p64
      %p67 = scmp.ne.s32.totalorder %s52, %s66
      %p68 = scmp.eq.s32.totalorder %s28, 0
      %p69 = por %p67, %p68
      %s70 = ssub.s32 %s29, %s48
      %s71 = ssub.s32 %s31, %s40
      %s72 = sor.u32 %s70, %s71
      %p73 = scmp.eq.s32.totalorder %s72, 0
      %s75 = sadd.s32 %s74, 1
      %s76 = scalar_select %p73, %s74, %s75
      %p79 = pneg %p73
      %p80 = scmp.eq.s32.totalorder %s22, 1
      %p81 = por %p79, %p80
      %p82 = scmp.ne.s32.totalorder %s74, %s77
      %p83 = scmp.eq.s32.totalorder %s22, 0
      %p84 = por %p82, %p83
      %p85 = scmp.ne.s32.totalorder %s74, %s77
      %p86 = scmp.eq.s32.totalorder %s27, 1
      %p87 = por %p85, %p86
      %p88 = scmp.ne.s32.totalorder %s77, %s78
      %p89 = scmp.eq.s32.totalorder %s27, 0
      %p90 = por %p88, %p89
      %p91 = scmp.ne.s32.totalorder %s77, %s78
      %p92 = scmp.eq.s32.totalorder %s28, 1
      %p93 = por %p91, %p92
      %p95 = scmp.ne.s32.totalorder %s78, %s94
      %p96 = scmp.eq.s32.totalorder %s28, 0
      %p97 = por %p95, %p96
      %s98 = ssub.s32 %s31, %s40
      %s99 = ssub.s32 %s30, %s44
      %s100 = sor.u32 %s98, %s99
      %p101 = scmp.eq.s32.totalorder %s100, 0
      %s103 = sadd.s32 %s102, 1
      %s104 = scalar_select %p101, %s102, %s103
      %p107 = pneg %p101
      %p108 = scmp.eq.s32.totalorder %s22, 1
      %p109 = por %p107, %p108
      %p110 = scmp.ne.s32.totalorder %s102, %s105
      %p111 = scmp.eq.s32.totalorder %s22, 0
      %p112 = por %p110, %p111
      %p113 = scmp.ne.s32.totalorder %s102, %s105
      %p114 = scmp.eq.s32.totalorder %s27, 1
      %p115 = por %p113, %p114
      %p116 = scmp.ne.s32.totalorder %s105, %s106
      %p117 = scmp.eq.s32.totalorder %s27, 0
      %p118 = por %p116, %p117
      %p119 = scmp.ne.s32.totalorder %s105, %s106
      %p120 = scmp.eq.s32.totalorder %s28, 1
      %p121 = por %p119, %p120
      %p123 = scmp.ne.s32.totalorder %s106, %s122
      %p124 = scmp.eq.s32.totalorder %s28, 0
      %p125 = por %p123, %p124
      %s126 = ssub.s32 %s31, %s40
      %s127 = ssub.s32 %s30, %s44
      %s128 = sor.u32 %s126, %s127
      %p129 = scmp.eq.s32.totalorder %s128, 0
      %s131 = sadd.s32 %s130, 1
      %s132 = scalar_select %p129, %s130, %s131
      %p135 = pneg %p129
      %p136 = scmp.eq.s32.totalorder %s22, 1
      %p137 = por %p135, %p136
      %p138 = scmp.ne.s32.totalorder %s130, %s133
      %p139 = scmp.eq.s32.totalorder %s22, 0
      %p140 = por %p138, %p139
      %p141 = scmp.ne.s32.totalorder %s130, %s133
      %p142 = scmp.eq.s32.totalorder %s27, 1
      %p143 = por %p141, %p142
      %p144 = scmp.ne.s32.totalorder %s133, %s134
      %p145 = scmp.eq.s32.totalorder %s27, 0
      %p146 = por %p144, %p145
      %p147 = scmp.ne.s32.totalorder %s133, %s134
      %p148 = scmp.eq.s32.totalorder %s28, 1
      %p149 = por %p147, %p148
      %p151 = scmp.ne.s32.totalorder %s134, %s150
      %p152 = scmp.eq.s32.totalorder %s28, 0
      %p153 = por %p151, %p152
      %s154 = ssub.s32 %s30, %s44
      %p155 = scmp.eq.s32.totalorder %s154, 0
      %s157 = sadd.s32 %s156, 1
      %s158 = scalar_select %p155, %s156, %s157
      %p161 = pneg %p155
      %p162 = scmp.eq.s32.totalorder %s22, 1
      %p163 = por %p161, %p162
      %p164 = scmp.ne.s32.totalorder %s156, %s159
      %p165 = scmp.eq.s32.totalorder %s22, 0
      %p166 = por %p164, %p165
      %p167 = scmp.ne.s32.totalorder %s156, %s159
      %p168 = scmp.eq.s32.totalorder %s27, 1
      %p169 = por %p167, %p168
      %p170 = scmp.ne.s32.totalorder %s159, %s160
      %p171 = scmp.eq.s32.totalorder %s27, 0
      %p172 = por %p170, %p171
      %p173 = scmp.ne.s32.totalorder %s159, %s160
      %p174 = scmp.eq.s32.totalorder %s28, 1
      %p175 = por %p173, %p174
      %p177 = scmp.ne.s32.totalorder %s160, %s176
      %p178 = scmp.eq.s32.totalorder %s28, 0
      %p179 = por %p177, %p178
      %s180 = ssub.s32 %s29, %s48
      %s181 = ssub.s32 %s30, %s44
      %s182 = sor.u32 %s180, %s181
      %p183 = scmp.eq.s32.totalorder %s182, 0
      %s185 = sadd.s32 %s184, 1
      %s186 = scalar_select %p183, %s184, %s185
      %p189 = pneg %p183
      %p190 = scmp.eq.s32.totalorder %s22, 1
      %p191 = por %p189, %p190
      %p192 = scmp.ne.s32.totalorder %s184, %s187
      %p193 = scmp.eq.s32.totalorder %s22, 0
      %p194 = por %p192, %p193
      %p195 = scmp.ne.s32.totalorder %s184, %s187
      %p196 = scmp.eq.s32.totalorder %s27, 1
      %p197 = por %p195, %p196
      %p198 = scmp.ne.s32.totalorder %s187, %s188
      %p199 = scmp.eq.s32.totalorder %s27, 0
      %p200 = por %p198, %p199
      %p201 = scmp.ne.s32.totalorder %s187, %s188
      %p202 = scmp.eq.s32.totalorder %s28, 1
      %p203 = por %p201, %p202
      %p205 = scmp.ne.s32.totalorder %s188, %s204
      %p206 = scmp.eq.s32.totalorder %s28, 0
      %p207 = por %p205, %p206
      %p208 = scmp.le.s32.totalorder 1, %s22
      %p209 = scmp.lt.s32.totalorder %s22, 3
      %p210 = pnand %p208, %p209
      %p211 = pneg %p210
      // Predicated region
      $region9: #{tpu_custom_call.1} parent=5 // pred_check
        _
      $region10: #{tpu_custom_call.1} parent=5 // pred_check_branch
        %213 = sbr.rel (%p210) target = $region12
      $region11: #{tpu_custom_call.1} parent=5 // pred_region
        %s214 = ssub.s32 %s22, 1
        // Predicated region
        $region13: #{tpu_custom_call.1} parent=11 // pred_check
          %p215 = pneg %p62
        $region14: #{tpu_custom_call.1} parent=11 // pred_check_branch
          %217 = sbr.rel (%p215) target = $region16
        $region15: #{tpu_custom_call.1} parent=11 // pred_region
          %s219 = ssub.s32 16, 16
          %220 = vsyncadd [#allocation5], %s219
          %223 = dma.hbm_to_smem %s0, 16, [#allocation2], [#allocation5]
        $region16: #{tpu_custom_call.1} parent=11 // pred_fallthru
          _
        // Predicated region
        $region17: #{tpu_custom_call.1} parent=11 // pred_check
          %p224 = pneg %p90
        $region18: #{tpu_custom_call.1} parent=11 // pred_check_branch
          %226 = sbr.rel (%p224) target = $region20
        $region19: #{tpu_custom_call.1} parent=11 // pred_region
          %s227 = smul.u32 2, %s32
          %s228 = smul.u32 4, %s34
          %s230 = ssub.s32 1024, 1024
          %231 = vsyncadd [#allocation3], %s230
          %s232 = smul.addr %s227, 4
          %s233 = sadd.s32 %s228, %s232
          %s234 = smul.addr %s233, 128
          %s235 = scalar_lea.hbm %s1, %s234
          %s236 = sshll.u32 [#allocation6], 4
          %s237 = int_to_ptr.vmem [resolvable:$true] %s236
          %242 = dma.hbm_to_vmem [thread:$0]  %s235, 1024, %s237, [#allocation3], 512, 512, 32
        $region20: #{tpu_custom_call.1} parent=11 // pred_fallthru
          _
      $region12: #{tpu_custom_call.1} parent=5 // pred_fallthru
        _
      %p243 = scmp.lt.s32.totalorder %s22, 2
      // Predicated region
      $region21: #{tpu_custom_call.1} parent=5 // pred_check
        %p244 = pneg %p243
      $region22: #{tpu_custom_call.1} parent=5 // pred_check_branch
        %246 = sbr.rel (%p244) target = $region24
      $region23: #{tpu_custom_call.1} parent=5 // pred_region
        // Predicated region
        $region25: #{tpu_custom_call.1} parent=23 // pred_check
          %p247 = pneg %p112
        $region26: #{tpu_custom_call.1} parent=23 // pred_check_branch
          %249 = sbr.rel (%p247) target = $region28
        $region27: #{tpu_custom_call.1} parent=23 // pred_region
          %s250 = sand.u32 %s22, 1
          %s251 = scalar_lea.sflag [#allocation8], %s250
          %s252 = sand.u32 %s102, 1
          %s253 = smul.addr %s252, 512
          %s254 = scalar_lea.vmem [#allocation7], %s253
          %s255 = smul.u32 64, %s31
          %s257 = ssub.s32 8192, 8192
          %258 = vsyncadd %s251, %s257
          %s259 = smul.addr %s255, 2
          %s260 = sadd.s32 %s30, %s259
          %s261 = smul.addr %s260, 128
          %s262 = scalar_lea.hbm %s2, %s261
          %s263 = sshll.u32 %s254, 4
          %s264 = int_to_ptr.vmem [resolvable:$true] %s263
          %269 = dma.hbm_to_vmem [thread:$0]  %s262, 8192, %s264, %s251, 256, 128, 8
        $region28: #{tpu_custom_call.1} parent=23 // pred_fallthru
          _
        // Predicated region
        $region29: #{tpu_custom_call.1} parent=23 // pred_check
          %p270 = pneg %p140
        $region30: #{tpu_custom_call.1} parent=23 // pred_check_branch
          %272 = sbr.rel (%p270) target = $region32
        $region31: #{tpu_custom_call.1} parent=23 // pred_region
          %s273 = sand.u32 %s22, 1
          %s274 = scalar_lea.sflag [#allocation8], %s273
          %s275 = sand.u32 %s130, 1
          %s276 = smul.addr %s275, 4096
          %s277 = scalar_lea.vmem [#allocation9], %s276
          %s278 = smul.u32 64, %s31
          %s280 = ssub.s32 65536, 65536
          %281 = vsyncadd %s274, %s280
          %s282 = smul.addr %s278, 2
          %s283 = sadd.s32 %s30, %s282
          %s284 = smul.addr %s283, 128
          %s285 = scalar_lea.hbm %s3, %s284
          %s286 = sshll.u32 %s277, 4
          %s287 = int_to_ptr.vmem [resolvable:$true] %s286
          %292 = dma.hbm_to_vmem [thread:$0]  %s285, 65536, %s287, %s274, 256, 128, 8
        $region32: #{tpu_custom_call.1} parent=23 // pred_fallthru
          _
        // Predicated region
        $region33: #{tpu_custom_call.1} parent=23 // pred_check
          %p293 = pneg %p166
        $region34: #{tpu_custom_call.1} parent=23 // pred_check_branch
          %295 = sbr.rel (%p293) target = $region36
        $region35: #{tpu_custom_call.1} parent=23 // pred_region
          %s296 = sand.u32 %s156, 1
          %s297 = scalar_lea.sflag [#allocation11], %s296
          %s298 = sand.u32 %s156, 1
          %s299 = scalar_lea.vmem [#allocation10], %s298
          %s301 = ssub.s32 16, 16
          %302 = vsyncadd %s297, %s301
          %s303 = smul.addr %s30, 16
          %s304 = scalar_lea.hbm %s4, %s303
          %s306 = sshll.u32 %s299, 4
          %s307 = int_to_ptr.vmem [resolvable:$true] %s306
          %309 = dma.hbm_to_vmem [thread:$0]  %s304, 16, %s307, %s297
        $region36: #{tpu_custom_call.1} parent=23 // pred_fallthru
          _
      $region24: #{tpu_custom_call.1} parent=5 // pred_fallthru
        _
      %p310 = scmp.le.s32.totalorder 1, %s22
      %p311 = scmp.lt.s32.totalorder %s22, 3
      %p312 = pnand %p310, %p311
      %p313 = pneg %p312
      // Predicated region
      $region37: #{tpu_custom_call.1} parent=5 // pred_check
        _
      $region38: #{tpu_custom_call.1} parent=5 // pred_check_branch
        %315 = sbr.rel (%p312) target = $region40
      $region39: #{tpu_custom_call.1} parent=5 // pred_region
        %s316 = ssub.s32 %s22, 1
        // Predicated region
        $region41: #{tpu_custom_call.1} parent=39 // pred_check
          %p317 = pneg %p62
        $region42: #{tpu_custom_call.1} parent=39 // pred_check_branch
          %319 = sbr.rel (%p317) target = $region44
        $region43: #{tpu_custom_call.1} parent=39 // pred_region
          %320 = dma.done [#allocation5], 16
        $region44: #{tpu_custom_call.1} parent=39 // pred_fallthru
          _
        // Predicated region
        $region45: #{tpu_custom_call.1} parent=39 // pred_check
          %p321 = pneg %p90
        $region46: #{tpu_custom_call.1} parent=39 // pred_check_branch
          %323 = sbr.rel (%p321) target = $region48
        $region47: #{tpu_custom_call.1} parent=39 // pred_region
          %324 = dma.done [#allocation3], 1024
        $region48: #{tpu_custom_call.1} parent=39 // pred_fallthru
          _
        %s325 = sand.u32 %s27, 1
        %s326 = scalar_lea.sflag [#allocation8], %s325
        %s327 = sand.u32 %s105, 1
        %s328 = smul.addr %s327, 512
        %s329 = scalar_lea.vmem [#allocation7], %s328
        // Predicated region
        $region49: #{tpu_custom_call.1} parent=39 // pred_check
          %p330 = pneg %p118
        $region50: #{tpu_custom_call.1} parent=39 // pred_check_branch
          %332 = sbr.rel (%p330) target = $region52
        $region51: #{tpu_custom_call.1} parent=39 // pred_region
          %333 = dma.done %s326, 8192
        $region52: #{tpu_custom_call.1} parent=39 // pred_fallthru
          _
        %s334 = sand.u32 %s27, 1
        %s335 = scalar_lea.sflag [#allocation8], %s334
        %s336 = sand.u32 %s133, 1
        %s337 = smul.addr %s336, 4096
        %s338 = scalar_lea.vmem [#allocation9], %s337
        // Predicated region
        $region53: #{tpu_custom_call.1} parent=39 // pred_check
          %p339 = pneg %p146
        $region54: #{tpu_custom_call.1} parent=39 // pred_check_branch
          %341 = sbr.rel (%p339) target = $region56
        $region55: #{tpu_custom_call.1} parent=39 // pred_region
          %342 = dma.done %s335, 65536
        $region56: #{tpu_custom_call.1} parent=39 // pred_fallthru
          _
        %s343 = sand.u32 %s159, 1
        %s344 = scalar_lea.sflag [#allocation11], %s343
        %s345 = sand.u32 %s159, 1
        %s346 = scalar_lea.vmem [#allocation10], %s345
        // Predicated region
        $region57: #{tpu_custom_call.1} parent=39 // pred_check
          %p347 = pneg %p172
        $region58: #{tpu_custom_call.1} parent=39 // pred_check_branch
          %349 = sbr.rel (%p347) target = $region60
        $region59: #{tpu_custom_call.1} parent=39 // pred_region
          %350 = dma.done %s344, 16
        $region60: #{tpu_custom_call.1} parent=39 // pred_fallthru
          _
        %351 = sfence
        %p352 = pneg %p62
        %p353 = pneg %p59
        %p354 = pneg %p90
        %p355 = pneg %p87
        %s356 = sand.u32 %s27, 1
        %s357 = scalar_lea.sflag [#allocation8], %s356
        %s358 = sand.u32 %s105, 1
        %s359 = smul.addr %s358, 512
        %s360 = scalar_lea.vmem [#allocation7], %s359
        %p361 = pneg %p118
        %p362 = pneg %p115
        %s363 = sand.u32 %s27, 1
        %s364 = scalar_lea.sflag [#allocation8], %s363
        %s365 = sand.u32 %s133, 1
        %s366 = smul.addr %s365, 4096
        %s367 = scalar_lea.vmem [#allocation9], %s366
        %p368 = pneg %p146
        %p369 = pneg %p143
        %s370 = sand.u32 %s159, 1
        %s371 = scalar_lea.sflag [#allocation11], %s370
        %s372 = sand.u32 %s159, 1
        %s373 = scalar_lea.vmem [#allocation10], %s372
        %p374 = pneg %p172
        %p375 = pneg %p169
        %p376 = pneg %p200
        %p377 = pneg %p197
        %s378 = sand.u32 %s187, 1
        %s379 = scalar_lea.sflag [#allocation4], %s378
        %s380 = sand.u32 %s187, 1
        %s381 = smul.addr %s380, 16
        %s382 = scalar_lea.vmem [#allocation12], %s381
        %s383 = smul.u32 2, %s32
        %s384 = smul.u32 4, %s34
        %s385 = smul.u32 64, %s34
        %s386 = smul.u32 64, %s34
        %s387 = smul.u32 2, %s32
        %v388 = vld [vmem:[%s329] sm:$0xff]
        %v389 = vld [vmem:[%s329 + $0x8] sm:$0xff]
        %v390 = vld [vmem:[%s329 + $0x10] sm:$0xff]
        %v391 = vld [vmem:[%s329 + $0x18] sm:$0xff]
        %v392 = vld [vmem:[%s329 + $0x20] sm:$0xff]
        %v393 = vld [vmem:[%s329 + $0x28] sm:$0xff]
        %v394 = vld [vmem:[%s329 + $0x30] sm:$0xff]
        %v395 = vld [vmem:[%s329 + $0x38] sm:$0xff]
        %v396 = vld [vmem:[%s329 + $0x40] sm:$0xff]
        %v397 = vld [vmem:[%s329 + $0x48] sm:$0xff]
        %v398 = vld [vmem:[%s329 + $0x50] sm:$0xff]
        %v399 = vld [vmem:[%s329 + $0x58] sm:$0xff]
        %v400 = vld [vmem:[%s329 + $0x60] sm:$0xff]
        %v401 = vld [vmem:[%s329 + $0x68] sm:$0xff]
        %v402 = vld [vmem:[%s329 + $0x70] sm:$0xff]
        %v403 = vld [vmem:[%s329 + $0x78] sm:$0xff]
        %v404 = vld [vmem:[%s329 + $0x80] sm:$0xff]
        %v405 = vld [vmem:[%s329 + $0x88] sm:$0xff]
        %v406 = vld [vmem:[%s329 + $0x90] sm:$0xff]
        %v407 = vld [vmem:[%s329 + $0x98] sm:$0xff]
        %v408 = vld [vmem:[%s329 + $0xa0] sm:$0xff]
        %v409 = vld [vmem:[%s329 + $0xa8] sm:$0xff]
        %v410 = vld [vmem:[%s329 + $0xb0] sm:$0xff]
        %v411 = vld [vmem:[%s329 + $0xb8] sm:$0xff]
        %v412 = vld [vmem:[%s329 + $0xc0] sm:$0xff]
        %v413 = vld [vmem:[%s329 + $0xc8] sm:$0xff]
        %v414 = vld [vmem:[%s329 + $0xd0] sm:$0xff]
        %v415 = vld [vmem:[%s329 + $0xd8] sm:$0xff]
        %v416 = vld [vmem:[%s329 + $0xe0] sm:$0xff]
        %v417 = vld [vmem:[%s329 + $0xe8] sm:$0xff]
        %v418 = vld [vmem:[%s329 + $0xf0] sm:$0xff]
        %v419 = vld [vmem:[%s329 + $0xf8] sm:$0xff]
        %v420 = vld [vmem:[%s329 + $0x100] sm:$0xff]
        %v421 = vld [vmem:[%s329 + $0x108] sm:$0xff]
        %v422 = vld [vmem:[%s329 + $0x110] sm:$0xff]
        %v423 = vld [vmem:[%s329 + $0x118] sm:$0xff]
        %v424 = vld [vmem:[%s329 + $0x120] sm:$0xff]
        %v425 = vld [vmem:[%s329 + $0x128] sm:$0xff]
        %v426 = vld [vmem:[%s329 + $0x130] sm:$0xff]
        %v427 = vld [vmem:[%s329 + $0x138] sm:$0xff]
        %v428 = vld [vmem:[%s329 + $0x140] sm:$0xff]
        %v429 = vld [vmem:[%s329 + $0x148] sm:$0xff]
        %v430 = vld [vmem:[%s329 + $0x150] sm:$0xff]
        %v431 = vld [vmem:[%s329 + $0x158] sm:$0xff]
        %v432 = vld [vmem:[%s329 + $0x160] sm:$0xff]
        %v433 = vld [vmem:[%s329 + $0x168] sm:$0xff]
        %v434 = vld [vmem:[%s329 + $0x170] sm:$0xff]
        %v435 = vld [vmem:[%s329 + $0x178] sm:$0xff]
        %v436 = vld [vmem:[%s329 + $0x180] sm:$0xff]
        %v437 = vld [vmem:[%s329 + $0x188] sm:$0xff]
        %v438 = vld [vmem:[%s329 + $0x190] sm:$0xff]
        %v439 = vld [vmem:[%s329 + $0x198] sm:$0xff]
        %v440 = vld [vmem:[%s329 + $0x1a0] sm:$0xff]
        %v441 = vld [vmem:[%s329 + $0x1a8] sm:$0xff]
        %v442 = vld [vmem:[%s329 + $0x1b0] sm:$0xff]
        %v443 = vld [vmem:[%s329 + $0x1b8] sm:$0xff]
        %v444 = vld [vmem:[%s329 + $0x1c0] sm:$0xff]
        %v445 = vld [vmem:[%s329 + $0x1c8] sm:$0xff]
        %v446 = vld [vmem:[%s329 + $0x1d0] sm:$0xff]
        %v447 = vld [vmem:[%s329 + $0x1d8] sm:$0xff]
        %v448 = vld [vmem:[%s329 + $0x1e0] sm:$0xff]
        %v449 = vld [vmem:[%s329 + $0x1e8] sm:$0xff]
        %v450 = vld [vmem:[%s329 + $0x1f0] sm:$0xff]
        %v451 = vld [vmem:[%s329 + $0x1f8] sm:$0xff]
        %s452 = sld [smem:[#allocation2]]
        %v453 = vld [vmem:[%s338] sm:$0xff]
        %v454 = vld [vmem:[%s338 + $0x8] sm:$0xff]
        %v455 = vld [vmem:[%s338 + $0x10] sm:$0xff]
        %v456 = vld [vmem:[%s338 + $0x18] sm:$0xff]
        %v457 = vld [vmem:[%s338 + $0x20] sm:$0xff]
        %v458 = vld [vmem:[%s338 + $0x28] sm:$0xff]
        %v459 = vld [vmem:[%s338 + $0x30] sm:$0xff]
        %v460 = vld [vmem:[%s338 + $0x38] sm:$0xff]
        %v461 = vld [vmem:[%s338 + $0x40] sm:$0xff]
        %v462 = vld [vmem:[%s338 + $0x48] sm:$0xff]
        %v463 = vld [vmem:[%s338 + $0x50] sm:$0xff]
        %v464 = vld [vmem:[%s338 + $0x58] sm:$0xff]
        %v465 = vld [vmem:[%s338 + $0x60] sm:$0xff]
        %v466 = vld [vmem:[%s338 + $0x68] sm:$0xff]
        %v467 = vld [vmem:[%s338 + $0x70] sm:$0xff]
        %v468 = vld [vmem:[%s338 + $0x78] sm:$0xff]
        %v469 = vld [vmem:[%s338 + $0x80] sm:$0xff]
        %v470 = vld [vmem:[%s338 + $0x88] sm:$0xff]
        %v471 = vld [vmem:[%s338 + $0x90] sm:$0xff]
        %v472 = vld [vmem:[%s338 + $0x98] sm:$0xff]
        %v473 = vld [vmem:[%s338 + $0xa0] sm:$0xff]
        %v474 = vld [vmem:[%s338 + $0xa8] sm:$0xff]
        %v475 = vld [vmem:[%s338 + $0xb0] sm:$0xff]
        %v476 = vld [vmem:[%s338 + $0xb8] sm:$0xff]
        %v477 = vld [vmem:[%s338 + $0xc0] sm:$0xff]
        %v478 = vld [vmem:[%s338 + $0xc8] sm:$0xff]
        %v479 = vld [vmem:[%s338 + $0xd0] sm:$0xff]
        %v480 = vld [vmem:[%s338 + $0xd8] sm:$0xff]
        %v481 = vld [vmem:[%s338 + $0xe0] sm:$0xff]
        %v482 = vld [vmem:[%s338 + $0xe8] sm:$0xff]
        %v483 = vld [vmem:[%s338 + $0xf0] sm:$0xff]
        %v484 = vld [vmem:[%s338 + $0xf8] sm:$0xff]
        %v485 = vld [vmem:[%s338 + $0x100] sm:$0xff]
        %v486 = vld [vmem:[%s338 + $0x108] sm:$0xff]
        %v487 = vld [vmem:[%s338 + $0x110] sm:$0xff]
        %v488 = vld [vmem:[%s338 + $0x118] sm:$0xff]
        %v489 = vld [vmem:[%s338 + $0x120] sm:$0xff]
        %v490 = vld [vmem:[%s338 + $0x128] sm:$0xff]
        %v491 = vld [vmem:[%s338 + $0x130] sm:$0xff]
        %v492 = vld [vmem:[%s338 + $0x138] sm:$0xff]
        %v493 = vld [vmem:[%s338 + $0x140] sm:$0xff]
        %v494 = vld [vmem:[%s338 + $0x148] sm:$0xff]
        %v495 = vld [vmem:[%s338 + $0x150] sm:$0xff]
        %v496 = vld [vmem:[%s338 + $0x158] sm:$0xff]
        %v497 = vld [vmem:[%s338 + $0x160] sm:$0xff]
        %v498 = vld [vmem:[%s338 + $0x168] sm:$0xff]
        %v499 = vld [vmem:[%s338 + $0x170] sm:$0xff]
        %v500 = vld [vmem:[%s338 + $0x178] sm:$0xff]
        %v501 = vld [vmem:[%s338 + $0x180] sm:$0xff]
        %v502 = vld [vmem:[%s338 + $0x188] sm:$0xff]
        %v503 = vld [vmem:[%s338 + $0x190] sm:$0xff]
        %v504 = vld [vmem:[%s338 + $0x198] sm:$0xff]
        %v505 = vld [vmem:[%s338 + $0x1a0] sm:$0xff]
        %v506 = vld [vmem:[%s338 + $0x1a8] sm:$0xff]
        %v507 = vld [vmem:[%s338 + $0x1b0] sm:$0xff]
        %v508 = vld [vmem:[%s338 + $0x1b8] sm:$0xff]
        %v509 = vld [vmem:[%s338 + $0x1c0] sm:$0xff]
        %v510 = vld [vmem:[%s338 + $0x1c8] sm:$0xff]
        %v511 = vld [vmem:[%s338 + $0x1d0] sm:$0xff]
        %v512 = vld [vmem:[%s338 + $0x1d8] sm:$0xff]
        %v513 = vld [vmem:[%s338 + $0x1e0] sm:$0xff]
        %v514 = vld [vmem:[%s338 + $0x1e8] sm:$0xff]
        %v515 = vld [vmem:[%s338 + $0x1f0] sm:$0xff]
        %v516 = vld [vmem:[%s338 + $0x1f8] sm:$0xff]
        %v517 = vstv %s452
        %v518 = vmul.f32 %v517, %v453
        %v519 = vmul.f32 %v517, %v454
        %v520 = vmul.f32 %v517, %v455
        %v521 = vmul.f32 %v517, %v456
        %v522 = vmul.f32 %v517, %v457
        %v523 = vmul.f32 %v517, %v458
        %v524 = vmul.f32 %v517, %v459
        %v525 = vmul.f32 %v517, %v460
        %v526 = vmul.f32 %v517, %v461
        %v527 = vmul.f32 %v517, %v462
        %v528 = vmul.f32 %v517, %v463
        %v529 = vmul.f32 %v517, %v464
        %v530 = vmul.f32 %v517, %v465
        %v531 = vmul.f32 %v517, %v466
        %v532 = vmul.f32 %v517, %v467
        %v533 = vmul.f32 %v517, %v468
        %v534 = vmul.f32 %v517, %v469
        %v535 = vmul.f32 %v517, %v470
        %v536 = vmul.f32 %v517, %v471
        %v537 = vmul.f32 %v517, %v472
        %v538 = vmul.f32 %v517, %v473
        %v539 = vmul.f32 %v517, %v474
        %v540 = vmul.f32 %v517, %v475
        %v541 = vmul.f32 %v517, %v476
        %v542 = vmul.f32 %v517, %v477
        %v543 = vmul.f32 %v517, %v478
        %v544 = vmul.f32 %v517, %v479
        %v545 = vmul.f32 %v517, %v480
        %v546 = vmul.f32 %v517, %v481
        %v547 = vmul.f32 %v517, %v482
        %v548 = vmul.f32 %v517, %v483
        %v549 = vmul.f32 %v517, %v484
        %v550 = vmul.f32 %v517, %v485
        %v551 = vmul.f32 %v517, %v486
        %v552 = vmul.f32 %v517, %v487
        %v553 = vmul.f32 %v517, %v488
        %v554 = vmul.f32 %v517, %v489
        %v555 = vmul.f32 %v517, %v490
        %v556 = vmul.f32 %v517, %v491
        %v557 = vmul.f32 %v517, %v492
        %v558 = vmul.f32 %v517, %v493
        %v559 = vmul.f32 %v517, %v494
        %v560 = vmul.f32 %v517, %v495
        %v561 = vmul.f32 %v517, %v496
        %v562 = vmul.f32 %v517, %v497
        %v563 = vmul.f32 %v517, %v498
        %v564 = vmul.f32 %v517, %v499
        %v565 = vmul.f32 %v517, %v500
        %v566 = vmul.f32 %v517, %v501
        %v567 = vmul.f32 %v517, %v502
        %v568 = vmul.f32 %v517, %v503
        %v569 = vmul.f32 %v517, %v504
        %v570 = vmul.f32 %v517, %v505
        %v571 = vmul.f32 %v517, %v506
        %v572 = vmul.f32 %v517, %v507
        %v573 = vmul.f32 %v517, %v508
        %v574 = vmul.f32 %v517, %v509
        %v575 = vmul.f32 %v517, %v510
        %v576 = vmul.f32 %v517, %v511
        %v577 = vmul.f32 %v517, %v512
        %v578 = vmul.f32 %v517, %v513
        %v579 = vmul.f32 %v517, %v514
        %v580 = vmul.f32 %v517, %v515
        %v581 = vmul.f32 %v517, %v516
        %v582 = vadd.f32 %v388, %v518
        %v583 = vadd.f32 %v389, %v519
        %v584 = vadd.f32 %v390, %v520
        %v585 = vadd.f32 %v391, %v521
        %v586 = vadd.f32 %v392, %v522
        %v587 = vadd.f32 %v393, %v523
        %v588 = vadd.f32 %v394, %v524
        %v589 = vadd.f32 %v395, %v525
        %v590 = vadd.f32 %v396, %v526
        %v591 = vadd.f32 %v397, %v527
        %v592 = vadd.f32 %v398, %v528
        %v593 = vadd.f32 %v399, %v529
        %v594 = vadd.f32 %v400, %v530
        %v595 = vadd.f32 %v401, %v531
        %v596 = vadd.f32 %v402, %v532
        %v597 = vadd.f32 %v403, %v533
        %v598 = vadd.f32 %v404, %v534
        %v599 = vadd.f32 %v405, %v535
        %v600 = vadd.f32 %v406, %v536
        %v601 = vadd.f32 %v407, %v537
        %v602 = vadd.f32 %v408, %v538
        %v603 = vadd.f32 %v409, %v539
        %v604 = vadd.f32 %v410, %v540
        %v605 = vadd.f32 %v411, %v541
        %v606 = vadd.f32 %v412, %v542
        %v607 = vadd.f32 %v413, %v543
        %v608 = vadd.f32 %v414, %v544
        %v609 = vadd.f32 %v415, %v545
        %v610 = vadd.f32 %v416, %v546
        %v611 = vadd.f32 %v417, %v547
        %v612 = vadd.f32 %v418, %v548
        %v613 = vadd.f32 %v419, %v549
        %v614 = vadd.f32 %v420, %v550
        %v615 = vadd.f32 %v421, %v551
        %v616 = vadd.f32 %v422, %v552
        %v617 = vadd.f32 %v423, %v553
        %v618 = vadd.f32 %v424, %v554
        %v619 = vadd.f32 %v425, %v555
        %v620 = vadd.f32 %v426, %v556
        %v621 = vadd.f32 %v427, %v557
        %v622 = vadd.f32 %v428, %v558
        %v623 = vadd.f32 %v429, %v559
        %v624 = vadd.f32 %v430, %v560
        %v625 = vadd.f32 %v431, %v561
        %v626 = vadd.f32 %v432, %v562
        %v627 = vadd.f32 %v433, %v563
        %v628 = vadd.f32 %v434, %v564
        %v629 = vadd.f32 %v435, %v565
        %v630 = vadd.f32 %v436, %v566
        %v631 = vadd.f32 %v437, %v567
        %v632 = vadd.f32 %v438, %v568
        %v633 = vadd.f32 %v439, %v569
        %v634 = vadd.f32 %v440, %v570
        %v635 = vadd.f32 %v441, %v571
        %v636 = vadd.f32 %v442, %v572
        %v637 = vadd.f32 %v443, %v573
        %v638 = vadd.f32 %v444, %v574
        %v639 = vadd.f32 %v445, %v575
        %v640 = vadd.f32 %v446, %v576
        %v641 = vadd.f32 %v447, %v577
        %v642 = vadd.f32 %v448, %v578
        %v643 = vadd.f32 %v449, %v579
        %v644 = vadd.f32 %v450, %v580
        %v645 = vadd.f32 %v451, %v581
        %s646 = sld [smem:[#allocation2 + $0x1]]
        %s647 = scalar_lea.vmem %s338, 512 [#allocation9]
        %v648 = vld [vmem:[%s647] sm:$0xff]
        %v649 = vld [vmem:[%s647 + $0x8] sm:$0xff]
        %v650 = vld [vmem:[%s647 + $0x10] sm:$0xff]
        %v651 = vld [vmem:[%s647 + $0x18] sm:$0xff]
        %v652 = vld [vmem:[%s647 + $0x20] sm:$0xff]
        %v653 = vld [vmem:[%s647 + $0x28] sm:$0xff]
        %v654 = vld [vmem:[%s647 + $0x30] sm:$0xff]
        %v655 = vld [vmem:[%s647 + $0x38] sm:$0xff]
        %v656 = vld [vmem:[%s647 + $0x40] sm:$0xff]
        %v657 = vld [vmem:[%s647 + $0x48] sm:$0xff]
        %v658 = vld [vmem:[%s647 + $0x50] sm:$0xff]
        %v659 = vld [vmem:[%s647 + $0x58] sm:$0xff]
        %v660 = vld [vmem:[%s647 + $0x60] sm:$0xff]
        %v661 = vld [vmem:[%s647 + $0x68] sm:$0xff]
        %v662 = vld [vmem:[%s647 + $0x70] sm:$0xff]
        %v663 = vld [vmem:[%s647 + $0x78] sm:$0xff]
        %v664 = vld [vmem:[%s647 + $0x80] sm:$0xff]
        %v665 = vld [vmem:[%s647 + $0x88] sm:$0xff]
        %v666 = vld [vmem:[%s647 + $0x90] sm:$0xff]
        %v667 = vld [vmem:[%s647 + $0x98] sm:$0xff]
        %v668 = vld [vmem:[%s647 + $0xa0] sm:$0xff]
        %v669 = vld [vmem:[%s647 + $0xa8] sm:$0xff]
        %v670 = vld [vmem:[%s647 + $0xb0] sm:$0xff]
        %v671 = vld [vmem:[%s647 + $0xb8] sm:$0xff]
        %v672 = vld [vmem:[%s647 + $0xc0] sm:$0xff]
        %v673 = vld [vmem:[%s647 + $0xc8] sm:$0xff]
        %v674 = vld [vmem:[%s647 + $0xd0] sm:$0xff]
        %v675 = vld [vmem:[%s647 + $0xd8] sm:$0xff]
        %v676 = vld [vmem:[%s647 + $0xe0] sm:$0xff]
        %v677 = vld [vmem:[%s647 + $0xe8] sm:$0xff]
        %v678 = vld [vmem:[%s647 + $0xf0] sm:$0xff]
        %v679 = vld [vmem:[%s647 + $0xf8] sm:$0xff]
        %v680 = vld [vmem:[%s647 + $0x100] sm:$0xff]
        %v681 = vld [vmem:[%s647 + $0x108] sm:$0xff]
        %v682 = vld [vmem:[%s647 + $0x110] sm:$0xff]
        %v683 = vld [vmem:[%s647 + $0x118] sm:$0xff]
        %v684 = vld [vmem:[%s647 + $0x120] sm:$0xff]
        %v685 = vld [vmem:[%s647 + $0x128] sm:$0xff]
        %v686 = vld [vmem:[%s647 + $0x130] sm:$0xff]
        %v687 = vld [vmem:[%s647 + $0x138] sm:$0xff]
        %v688 = vld [vmem:[%s647 + $0x140] sm:$0xff]
        %v689 = vld [vmem:[%s647 + $0x148] sm:$0xff]
        %v690 = vld [vmem:[%s647 + $0x150] sm:$0xff]
        %v691 = vld [vmem:[%s647 + $0x158] sm:$0xff]
        %v692 = vld [vmem:[%s647 + $0x160] sm:$0xff]
        %v693 = vld [vmem:[%s647 + $0x168] sm:$0xff]
        %v694 = vld [vmem:[%s647 + $0x170] sm:$0xff]
        %v695 = vld [vmem:[%s647 + $0x178] sm:$0xff]
        %v696 = vld [vmem:[%s647 + $0x180] sm:$0xff]
        %v697 = vld [vmem:[%s647 + $0x188] sm:$0xff]
        %v698 = vld [vmem:[%s647 + $0x190] sm:$0xff]
        %v699 = vld [vmem:[%s647 + $0x198] sm:$0xff]
        %v700 = vld [vmem:[%s647 + $0x1a0] sm:$0xff]
        %v701 = vld [vmem:[%s647 + $0x1a8] sm:$0xff]
        %v702 = vld [vmem:[%s647 + $0x1b0] sm:$0xff]
        %v703 = vld [vmem:[%s647 + $0x1b8] sm:$0xff]
        %v704 = vld [vmem:[%s647 + $0x1c0] sm:$0xff]
        %v705 = vld [vmem:[%s647 + $0x1c8] sm:$0xff]
        %v706 = vld [vmem:[%s647 + $0x1d0] sm:$0xff]
        %v707 = vld [vmem:[%s647 + $0x1d8] sm:$0xff]
        %v708 = vld [vmem:[%s647 + $0x1e0] sm:$0xff]
        %v709 = vld [vmem:[%s647 + $0x1e8] sm:$0xff]
        %v710 = vld [vmem:[%s647 + $0x1f0] sm:$0xff]
        %v711 = vld [vmem:[%s647 + $0x1f8] sm:$0xff]
        %v712 = vstv %s646
        %v713 = vmul.f32 %v712, %v648
        %v714 = vmul.f32 %v712, %v649
        %v715 = vmul.f32 %v712, %v650
        %v716 = vmul.f32 %v712, %v651
        %v717 = vmul.f32 %v712, %v652
        %v718 = vmul.f32 %v712, %v653
        %v719 = vmul.f32 %v712, %v654
        %v720 = vmul.f32 %v712, %v655
        %v721 = vmul.f32 %v712, %v656
        %v722 = vmul.f32 %v712, %v657
        %v723 = vmul.f32 %v712, %v658
        %v724 = vmul.f32 %v712, %v659
        %v725 = vmul.f32 %v712, %v660
        %v726 = vmul.f32 %v712, %v661
        %v727 = vmul.f32 %v712, %v662
        %v728 = vmul.f32 %v712, %v663
        %v729 = vmul.f32 %v712, %v664
        %v730 = vmul.f32 %v712, %v665
        %v731 = vmul.f32 %v712, %v666
        %v732 = vmul.f32 %v712, %v667
        %v733 = vmul.f32 %v712, %v668
        %v734 = vmul.f32 %v712, %v669
        %v735 = vmul.f32 %v712, %v670
        %v736 = vmul.f32 %v712, %v671
        %v737 = vmul.f32 %v712, %v672
        %v738 = vmul.f32 %v712, %v673
        %v739 = vmul.f32 %v712, %v674
        %v740 = vmul.f32 %v712, %v675
        %v741 = vmul.f32 %v712, %v676
        %v742 = vmul.f32 %v712, %v677
        %v743 = vmul.f32 %v712, %v678
        %v744 = vmul.f32 %v712, %v679
        %v745 = vmul.f32 %v712, %v680
        %v746 = vmul.f32 %v712, %v681
        %v747 = vmul.f32 %v712, %v682
        %v748 = vmul.f32 %v712, %v683
        %v749 = vmul.f32 %v712, %v684
        %v750 = vmul.f32 %v712, %v685
        %v751 = vmul.f32 %v712, %v686
        %v752 = vmul.f32 %v712, %v687
        %v753 = vmul.f32 %v712, %v688
        %v754 = vmul.f32 %v712, %v689
        %v755 = vmul.f32 %v712, %v690
        %v756 = vmul.f32 %v712, %v691
        %v757 = vmul.f32 %v712, %v692
        %v758 = vmul.f32 %v712, %v693
        %v759 = vmul.f32 %v712, %v694
        %v760 = vmul.f32 %v712, %v695
        %v761 = vmul.f32 %v712, %v696
        %v762 = vmul.f32 %v712, %v697
        %v763 = vmul.f32 %v712, %v698
        %v764 = vmul.f32 %v712, %v699
        %v765 = vmul.f32 %v712, %v700
        %v766 = vmul.f32 %v712, %v701
        %v767 = vmul.f32 %v712, %v702
        %v768 = vmul.f32 %v712, %v703
        %v769 = vmul.f32 %v712, %v704
        %v770 = vmul.f32 %v712, %v705
        %v771 = vmul.f32 %v712, %v706
        %v772 = vmul.f32 %v712, %v707
        %v773 = vmul.f32 %v712, %v708
        %v774 = vmul.f32 %v712, %v709
        %v775 = vmul.f32 %v712, %v710
        %v776 = vmul.f32 %v712, %v711
        %v777 = vadd.f32 %v582, %v713
        %v778 = vadd.f32 %v583, %v714
        %v779 = vadd.f32 %v584, %v715
        %v780 = vadd.f32 %v585, %v716
        %v781 = vadd.f32 %v586, %v717
        %v782 = vadd.f32 %v587, %v718
        %v783 = vadd.f32 %v588, %v719
        %v784 = vadd.f32 %v589, %v720
        %v785 = vadd.f32 %v590, %v721
        %v786 = vadd.f32 %v591, %v722
        %v787 = vadd.f32 %v592, %v723
        %v788 = vadd.f32 %v593, %v724
        %v789 = vadd.f32 %v594, %v725
        %v790 = vadd.f32 %v595, %v726
        %v791 = vadd.f32 %v596, %v727
        %v792 = vadd.f32 %v597, %v728
        %v793 = vadd.f32 %v598, %v729
        %v794 = vadd.f32 %v599, %v730
        %v795 = vadd.f32 %v600, %v731
        %v796 = vadd.f32 %v601, %v732
        %v797 = vadd.f32 %v602, %v733
        %v798 = vadd.f32 %v603, %v734
        %v799 = vadd.f32 %v604, %v735
        %v800 = vadd.f32 %v605, %v736
        %v801 = vadd.f32 %v606, %v737
        %v802 = vadd.f32 %v607, %v738
        %v803 = vadd.f32 %v608, %v739
        %v804 = vadd.f32 %v609, %v740
        %v805 = vadd.f32 %v610, %v741
        %v806 = vadd.f32 %v611, %v742
        %v807 = vadd.f32 %v612, %v743
        %v808 = vadd.f32 %v613, %v744
        %v809 = vadd.f32 %v614, %v745
        %v810 = vadd.f32 %v615, %v746
        %v811 = vadd.f32 %v616, %v747
        %v812 = vadd.f32 %v617, %v748
        %v813 = vadd.f32 %v618, %v749
        %v814 = vadd.f32 %v619, %v750
        %v815 = vadd.f32 %v620, %v751
        %v816 = vadd.f32 %v621, %v752
        %v817 = vadd.f32 %v622, %v753
        %v818 = vadd.f32 %v623, %v754
        %v819 = vadd.f32 %v624, %v755
        %v820 = vadd.f32 %v625, %v756
        %v821 = vadd.f32 %v626, %v757
        %v822 = vadd.f32 %v627, %v758
        %v823 = vadd.f32 %v628, %v759
        %v824 = vadd.f32 %v629, %v760
        %v825 = vadd.f32 %v630, %v761
        %v826 = vadd.f32 %v631, %v762
        %v827 = vadd.f32 %v632, %v763
        %v828 = vadd.f32 %v633, %v764
        %v829 = vadd.f32 %v634, %v765
        %v830 = vadd.f32 %v635, %v766
        %v831 = vadd.f32 %v636, %v767
        %v832 = vadd.f32 %v637, %v768
        %v833 = vadd.f32 %v638, %v769
        %v834 = vadd.f32 %v639, %v770
        %v835 = vadd.f32 %v640, %v771
        %v836 = vadd.f32 %v641, %v772
        %v837 = vadd.f32 %v642, %v773
        %v838 = vadd.f32 %v643, %v774
        %v839 = vadd.f32 %v644, %v775
        %v840 = vadd.f32 %v645, %v776
        %s841 = sld [smem:[#allocation2 + $0x2]]
        %s842 = scalar_lea.vmem %s338, 1024 [#allocation9]
        %v843 = vld [vmem:[%s842] sm:$0xff]
        %v844 = vld [vmem:[%s842 + $0x8] sm:$0xff]
        %v845 = vld [vmem:[%s842 + $0x10] sm:$0xff]
        %v846 = vld [vmem:[%s842 + $0x18] sm:$0xff]
        %v847 = vld [vmem:[%s842 + $0x20] sm:$0xff]
        %v848 = vld [vmem:[%s842 + $0x28] sm:$0xff]
        %v849 = vld [vmem:[%s842 + $0x30] sm:$0xff]
        %v850 = vld [vmem:[%s842 + $0x38] sm:$0xff]
        %v851 = vld [vmem:[%s842 + $0x40] sm:$0xff]
        %v852 = vld [vmem:[%s842 + $0x48] sm:$0xff]
        %v853 = vld [vmem:[%s842 + $0x50] sm:$0xff]
        %v854 = vld [vmem:[%s842 + $0x58] sm:$0xff]
        %v855 = vld [vmem:[%s842 + $0x60] sm:$0xff]
        %v856 = vld [vmem:[%s842 + $0x68] sm:$0xff]
        %v857 = vld [vmem:[%s842 + $0x70] sm:$0xff]
        %v858 = vld [vmem:[%s842 + $0x78] sm:$0xff]
        %v859 = vld [vmem:[%s842 + $0x80] sm:$0xff]
        %v860 = vld [vmem:[%s842 + $0x88] sm:$0xff]
        %v861 = vld [vmem:[%s842 + $0x90] sm:$0xff]
        %v862 = vld [vmem:[%s842 + $0x98] sm:$0xff]
        %v863 = vld [vmem:[%s842 + $0xa0] sm:$0xff]
        %v864 = vld [vmem:[%s842 + $0xa8] sm:$0xff]
        %v865 = vld [vmem:[%s842 + $0xb0] sm:$0xff]
        %v866 = vld [vmem:[%s842 + $0xb8] sm:$0xff]
        %v867 = vld [vmem:[%s842 + $0xc0] sm:$0xff]
        %v868 = vld [vmem:[%s842 + $0xc8] sm:$0xff]
        %v869 = vld [vmem:[%s842 + $0xd0] sm:$0xff]
        %v870 = vld [vmem:[%s842 + $0xd8] sm:$0xff]
        %v871 = vld [vmem:[%s842 + $0xe0] sm:$0xff]
        %v872 = vld [vmem:[%s842 + $0xe8] sm:$0xff]
        %v873 = vld [vmem:[%s842 + $0xf0] sm:$0xff]
        %v874 = vld [vmem:[%s842 + $0xf8] sm:$0xff]
        %v875 = vld [vmem:[%s842 + $0x100] sm:$0xff]
        %v876 = vld [vmem:[%s842 + $0x108] sm:$0xff]
        %v877 = vld [vmem:[%s842 + $0x110] sm:$0xff]
        %v878 = vld [vmem:[%s842 + $0x118] sm:$0xff]
        %v879 = vld [vmem:[%s842 + $0x120] sm:$0xff]
        %v880 = vld [vmem:[%s842 + $0x128] sm:$0xff]
        %v881 = vld [vmem:[%s842 + $0x130] sm:$0xff]
        %v882 = vld [vmem:[%s842 + $0x138] sm:$0xff]
        %v883 = vld [vmem:[%s842 + $0x140] sm:$0xff]
        %v884 = vld [vmem:[%s842 + $0x148] sm:$0xff]
        %v885 = vld [vmem:[%s842 + $0x150] sm:$0xff]
        %v886 = vld [vmem:[%s842 + $0x158] sm:$0xff]
        %v887 = vld [vmem:[%s842 + $0x160] sm:$0xff]
        %v888 = vld [vmem:[%s842 + $0x168] sm:$0xff]
        %v889 = vld [vmem:[%s842 + $0x170] sm:$0xff]
        %v890 = vld [vmem:[%s842 + $0x178] sm:$0xff]
        %v891 = vld [vmem:[%s842 + $0x180] sm:$0xff]
        %v892 = vld [vmem:[%s842 + $0x188] sm:$0xff]
        %v893 = vld [vmem:[%s842 + $0x190] sm:$0xff]
        %v894 = vld [vmem:[%s842 + $0x198] sm:$0xff]
        %v895 = vld [vmem:[%s842 + $0x1a0] sm:$0xff]
        %v896 = vld [vmem:[%s842 + $0x1a8] sm:$0xff]
        %v897 = vld [vmem:[%s842 + $0x1b0] sm:$0xff]
        %v898 = vld [vmem:[%s842 + $0x1b8] sm:$0xff]
        %v899 = vld [vmem:[%s842 + $0x1c0] sm:$0xff]
        %v900 = vld [vmem:[%s842 + $0x1c8] sm:$0xff]
        %v901 = vld [vmem:[%s842 + $0x1d0] sm:$0xff]
        %v902 = vld [vmem:[%s842 + $0x1d8] sm:$0xff]
        %v903 = vld [vmem:[%s842 + $0x1e0] sm:$0xff]
        %v904 = vld [vmem:[%s842 + $0x1e8] sm:$0xff]
        %v905 = vld [vmem:[%s842 + $0x1f0] sm:$0xff]
        %v906 = vld [vmem:[%s842 + $0x1f8] sm:$0xff]
        %v907 = vstv %s841
        %v908 = vmul.f32 %v907, %v843
        %v909 = vmul.f32 %v907, %v844
        %v910 = vmul.f32 %v907, %v845
        %v911 = vmul.f32 %v907, %v846
        %v912 = vmul.f32 %v907, %v847
        %v913 = vmul.f32 %v907, %v848
        %v914 = vmul.f32 %v907, %v849
        %v915 = vmul.f32 %v907, %v850
        %v916 = vmul.f32 %v907, %v851
        %v917 = vmul.f32 %v907, %v852
        %v918 = vmul.f32 %v907, %v853
        %v919 = vmul.f32 %v907, %v854
        %v920 = vmul.f32 %v907, %v855
        %v921 = vmul.f32 %v907, %v856
        %v922 = vmul.f32 %v907, %v857
        %v923 = vmul.f32 %v907, %v858
        %v924 = vmul.f32 %v907, %v859
        %v925 = vmul.f32 %v907, %v860
        %v926 = vmul.f32 %v907, %v861
        %v927 = vmul.f32 %v907, %v862
        %v928 = vmul.f32 %v907, %v863
        %v929 = vmul.f32 %v907, %v864
        %v930 = vmul.f32 %v907, %v865
        %v931 = vmul.f32 %v907, %v866
        %v932 = vmul.f32 %v907, %v867
        %v933 = vmul.f32 %v907, %v868
        %v934 = vmul.f32 %v907, %v869
        %v935 = vmul.f32 %v907, %v870
        %v936 = vmul.f32 %v907, %v871
        %v937 = vmul.f32 %v907, %v872
        %v938 = vmul.f32 %v907, %v873
        %v939 = vmul.f32 %v907, %v874
        %v940 = vmul.f32 %v907, %v875
        %v941 = vmul.f32 %v907, %v876
        %v942 = vmul.f32 %v907, %v877
        %v943 = vmul.f32 %v907, %v878
        %v944 = vmul.f32 %v907, %v879
        %v945 = vmul.f32 %v907, %v880
        %v946 = vmul.f32 %v907, %v881
        %v947 = vmul.f32 %v907, %v882
        %v948 = vmul.f32 %v907, %v883
        %v949 = vmul.f32 %v907, %v884
        %v950 = vmul.f32 %v907, %v885
        %v951 = vmul.f32 %v907, %v886
        %v952 = vmul.f32 %v907, %v887
        %v953 = vmul.f32 %v907, %v888
        %v954 = vmul.f32 %v907, %v889
        %v955 = vmul.f32 %v907, %v890
        %v956 = vmul.f32 %v907, %v891
        %v957 = vmul.f32 %v907, %v892
        %v958 = vmul.f32 %v907, %v893
        %v959 = vmul.f32 %v907, %v894
        %v960 = vmul.f32 %v907, %v895
        %v961 = vmul.f32 %v907, %v896
        %v962 = vmul.f32 %v907, %v897
        %v963 = vmul.f32 %v907, %v898
        %v964 = vmul.f32 %v907, %v899
        %v965 = vmul.f32 %v907, %v900
        %v966 = vmul.f32 %v907, %v901
        %v967 = vmul.f32 %v907, %v902
        %v968 = vmul.f32 %v907, %v903
        %v969 = vmul.f32 %v907, %v904
        %v970 = vmul.f32 %v907, %v905
        %v971 = vmul.f32 %v907, %v906
        %v972 = vadd.f32 %v777, %v908
        %v973 = vadd.f32 %v778, %v909
        %v974 = vadd.f32 %v779, %v910
        %v975 = vadd.f32 %v780, %v911
        %v976 = vadd.f32 %v781, %v912
        %v977 = vadd.f32 %v782, %v913
        %v978 = vadd.f32 %v783, %v914
        %v979 = vadd.f32 %v784, %v915
        %v980 = vadd.f32 %v785, %v916
        %v981 = vadd.f32 %v786, %v917
        %v982 = vadd.f32 %v787, %v918
        %v983 = vadd.f32 %v788, %v919
        %v984 = vadd.f32 %v789, %v920
        %v985 = vadd.f32 %v790, %v921
        %v986 = vadd.f32 %v791, %v922
        %v987 = vadd.f32 %v792, %v923
        %v988 = vadd.f32 %v793, %v924
        %v989 = vadd.f32 %v794, %v925
        %v990 = vadd.f32 %v795, %v926
        %v991 = vadd.f32 %v796, %v927
        %v992 = vadd.f32 %v797, %v928
        %v993 = vadd.f32 %v798, %v929
        %v994 = vadd.f32 %v799, %v930
        %v995 = vadd.f32 %v800, %v931
        %v996 = vadd.f32 %v801, %v932
        %v997 = vadd.f32 %v802, %v933
        %v998 = vadd.f32 %v803, %v934
        %v999 = vadd.f32 %v804, %v935
        %v1000 = vadd.f32 %v805, %v936
        %v1001 = vadd.f32 %v806, %v937
        %v1002 = vadd.f32 %v807, %v938
        %v1003 = vadd.f32 %v808, %v939
        %v1004 = vadd.f32 %v809, %v940
        %v1005 = vadd.f32 %v810, %v941
        %v1006 = vadd.f32 %v811, %v942
        %v1007 = vadd.f32 %v812, %v943
        %v1008 = vadd.f32 %v813, %v944
        %v1009 = vadd.f32 %v814, %v945
        %v1010 = vadd.f32 %v815, %v946
        %v1011 = vadd.f32 %v816, %v947
        %v1012 = vadd.f32 %v817, %v948
        %v1013 = vadd.f32 %v818, %v949
        %v1014 = vadd.f32 %v819, %v950
        %v1015 = vadd.f32 %v820, %v951
        %v1016 = vadd.f32 %v821, %v952
        %v1017 = vadd.f32 %v822, %v953
        %v1018 = vadd.f32 %v823, %v954
        %v1019 = vadd.f32 %v824, %v955
        %v1020 = vadd.f32 %v825, %v956
        %v1021 = vadd.f32 %v826, %v957
        %v1022 = vadd.f32 %v827, %v958
        %v1023 = vadd.f32 %v828, %v959
        %v1024 = vadd.f32 %v829, %v960
        %v1025 = vadd.f32 %v830, %v961
        %v1026 = vadd.f32 %v831, %v962
        %v1027 = vadd.f32 %v832, %v963
        %v1028 = vadd.f32 %v833, %v964
        %v1029 = vadd.f32 %v834, %v965
        %v1030 = vadd.f32 %v835, %v966
        %v1031 = vadd.f32 %v836, %v967
        %v1032 = vadd.f32 %v837, %v968
        %v1033 = vadd.f32 %v838, %v969
        %v1034 = vadd.f32 %v839, %v970
        %v1035 = vadd.f32 %v840, %v971
        %s1036 = sld [smem:[#allocation2 + $0x3]]
        %s1037 = scalar_lea.vmem %s338, 1536 [#allocation9]
        %v1038 = vld [vmem:[%s1037] sm:$0xff]
        %v1039 = vld [vmem:[%s1037 + $0x8] sm:$0xff]
        %v1040 = vld [vmem:[%s1037 + $0x10] sm:$0xff]
        %v1041 = vld [vmem:[%s1037 + $0x18] sm:$0xff]
        %v1042 = vld [vmem:[%s1037 + $0x20] sm:$0xff]
        %v1043 = vld [vmem:[%s1037 + $0x28] sm:$0xff]
        %v1044 = vld [vmem:[%s1037 + $0x30] sm:$0xff]
        %v1045 = vld [vmem:[%s1037 + $0x38] sm:$0xff]
        %v1046 = vld [vmem:[%s1037 + $0x40] sm:$0xff]
        %v1047 = vld [vmem:[%s1037 + $0x48] sm:$0xff]
        %v1048 = vld [vmem:[%s1037 + $0x50] sm:$0xff]
        %v1049 = vld [vmem:[%s1037 + $0x58] sm:$0xff]
        %v1050 = vld [vmem:[%s1037 + $0x60] sm:$0xff]
        %v1051 = vld [vmem:[%s1037 + $0x68] sm:$0xff]
        %v1052 = vld [vmem:[%s1037 + $0x70] sm:$0xff]
        %v1053 = vld [vmem:[%s1037 + $0x78] sm:$0xff]
        %v1054 = vld [vmem:[%s1037 + $0x80] sm:$0xff]
        %v1055 = vld [vmem:[%s1037 + $0x88] sm:$0xff]
        %v1056 = vld [vmem:[%s1037 + $0x90] sm:$0xff]
        %v1057 = vld [vmem:[%s1037 + $0x98] sm:$0xff]
        %v1058 = vld [vmem:[%s1037 + $0xa0] sm:$0xff]
        %v1059 = vld [vmem:[%s1037 + $0xa8] sm:$0xff]
        %v1060 = vld [vmem:[%s1037 + $0xb0] sm:$0xff]
        %v1061 = vld [vmem:[%s1037 + $0xb8] sm:$0xff]
        %v1062 = vld [vmem:[%s1037 + $0xc0] sm:$0xff]
        %v1063 = vld [vmem:[%s1037 + $0xc8] sm:$0xff]
        %v1064 = vld [vmem:[%s1037 + $0xd0] sm:$0xff]
        %v1065 = vld [vmem:[%s1037 + $0xd8] sm:$0xff]
        %v1066 = vld [vmem:[%s1037 + $0xe0] sm:$0xff]
        %v1067 = vld [vmem:[%s1037 + $0xe8] sm:$0xff]
        %v1068 = vld [vmem:[%s1037 + $0xf0] sm:$0xff]
        %v1069 = vld [vmem:[%s1037 + $0xf8] sm:$0xff]
        %v1070 = vld [vmem:[%s1037 + $0x100] sm:$0xff]
        %v1071 = vld [vmem:[%s1037 + $0x108] sm:$0xff]
        %v1072 = vld [vmem:[%s1037 + $0x110] sm:$0xff]
        %v1073 = vld [vmem:[%s1037 + $0x118] sm:$0xff]
        %v1074 = vld [vmem:[%s1037 + $0x120] sm:$0xff]
        %v1075 = vld [vmem:[%s1037 + $0x128] sm:$0xff]
        %v1076 = vld [vmem:[%s1037 + $0x130] sm:$0xff]
        %v1077 = vld [vmem:[%s1037 + $0x138] sm:$0xff]
        %v1078 = vld [vmem:[%s1037 + $0x140] sm:$0xff]
        %v1079 = vld [vmem:[%s1037 + $0x148] sm:$0xff]
        %v1080 = vld [vmem:[%s1037 + $0x150] sm:$0xff]
        %v1081 = vld [vmem:[%s1037 + $0x158] sm:$0xff]
        %v1082 = vld [vmem:[%s1037 + $0x160] sm:$0xff]
        %v1083 = vld [vmem:[%s1037 + $0x168] sm:$0xff]
        %v1084 = vld [vmem:[%s1037 + $0x170] sm:$0xff]
        %v1085 = vld [vmem:[%s1037 + $0x178] sm:$0xff]
        %v1086 = vld [vmem:[%s1037 + $0x180] sm:$0xff]
        %v1087 = vld [vmem:[%s1037 + $0x188] sm:$0xff]
        %v1088 = vld [vmem:[%s1037 + $0x190] sm:$0xff]
        %v1089 = vld [vmem:[%s1037 + $0x198] sm:$0xff]
        %v1090 = vld [vmem:[%s1037 + $0x1a0] sm:$0xff]
        %v1091 = vld [vmem:[%s1037 + $0x1a8] sm:$0xff]
        %v1092 = vld [vmem:[%s1037 + $0x1b0] sm:$0xff]
        %v1093 = vld [vmem:[%s1037 + $0x1b8] sm:$0xff]
        %v1094 = vld [vmem:[%s1037 + $0x1c0] sm:$0xff]
        %v1095 = vld [vmem:[%s1037 + $0x1c8] sm:$0xff]
        %v1096 = vld [vmem:[%s1037 + $0x1d0] sm:$0xff]
        %v1097 = vld [vmem:[%s1037 + $0x1d8] sm:$0xff]
        %v1098 = vld [vmem:[%s1037 + $0x1e0] sm:$0xff]
        %v1099 = vld [vmem:[%s1037 + $0x1e8] sm:$0xff]
        %v1100 = vld [vmem:[%s1037 + $0x1f0] sm:$0xff]
        %v1101 = vld [vmem:[%s1037 + $0x1f8] sm:$0xff]
        %v1102 = vstv %s1036
        %v1103 = vmul.f32 %v1102, %v1038
        %v1104 = vmul.f32 %v1102, %v1039
        %v1105 = vmul.f32 %v1102, %v1040
        %v1106 = vmul.f32 %v1102, %v1041
        %v1107 = vmul.f32 %v1102, %v1042
        %v1108 = vmul.f32 %v1102, %v1043
        %v1109 = vmul.f32 %v1102, %v1044
        %v1110 = vmul.f32 %v1102, %v1045
        %v1111 = vmul.f32 %v1102, %v1046
        %v1112 = vmul.f32 %v1102, %v1047
        %v1113 = vmul.f32 %v1102, %v1048
        %v1114 = vmul.f32 %v1102, %v1049
        %v1115 = vmul.f32 %v1102, %v1050
        %v1116 = vmul.f32 %v1102, %v1051
        %v1117 = vmul.f32 %v1102, %v1052
        %v1118 = vmul.f32 %v1102, %v1053
        %v1119 = vmul.f32 %v1102, %v1054
        %v1120 = vmul.f32 %v1102, %v1055
        %v1121 = vmul.f32 %v1102, %v1056
        %v1122 = vmul.f32 %v1102, %v1057
        %v1123 = vmul.f32 %v1102, %v1058
        %v1124 = vmul.f32 %v1102, %v1059
        %v1125 = vmul.f32 %v1102, %v1060
        %v1126 = vmul.f32 %v1102, %v1061
        %v1127 = vmul.f32 %v1102, %v1062
        %v1128 = vmul.f32 %v1102, %v1063
        %v1129 = vmul.f32 %v1102, %v1064
        %v1130 = vmul.f32 %v1102, %v1065
        %v1131 = vmul.f32 %v1102, %v1066
        %v1132 = vmul.f32 %v1102, %v1067
        %v1133 = vmul.f32 %v1102, %v1068
        %v1134 = vmul.f32 %v1102, %v1069
        %v1135 = vmul.f32 %v1102, %v1070
        %v1136 = vmul.f32 %v1102, %v1071
        %v1137 = vmul.f32 %v1102, %v1072
        %v1138 = vmul.f32 %v1102, %v1073
        %v1139 = vmul.f32 %v1102, %v1074
        %v1140 = vmul.f32 %v1102, %v1075
        %v1141 = vmul.f32 %v1102, %v1076
        %v1142 = vmul.f32 %v1102, %v1077
        %v1143 = vmul.f32 %v1102, %v1078
        %v1144 = vmul.f32 %v1102, %v1079
        %v1145 = vmul.f32 %v1102, %v1080
        %v1146 = vmul.f32 %v1102, %v1081
        %v1147 = vmul.f32 %v1102, %v1082
        %v1148 = vmul.f32 %v1102, %v1083
        %v1149 = vmul.f32 %v1102, %v1084
        %v1150 = vmul.f32 %v1102, %v1085
        %v1151 = vmul.f32 %v1102, %v1086
        %v1152 = vmul.f32 %v1102, %v1087
        %v1153 = vmul.f32 %v1102, %v1088
        %v1154 = vmul.f32 %v1102, %v1089
        %v1155 = vmul.f32 %v1102, %v1090
        %v1156 = vmul.f32 %v1102, %v1091
        %v1157 = vmul.f32 %v1102, %v1092
        %v1158 = vmul.f32 %v1102, %v1093
        %v1159 = vmul.f32 %v1102, %v1094
        %v1160 = vmul.f32 %v1102, %v1095
        %v1161 = vmul.f32 %v1102, %v1096
        %v1162 = vmul.f32 %v1102, %v1097
        %v1163 = vmul.f32 %v1102, %v1098
        %v1164 = vmul.f32 %v1102, %v1099
        %v1165 = vmul.f32 %v1102, %v1100
        %v1166 = vmul.f32 %v1102, %v1101
        %v1167 = vadd.f32 %v972, %v1103
        %v1168 = vadd.f32 %v973, %v1104
        %v1169 = vadd.f32 %v974, %v1105
        %v1170 = vadd.f32 %v975, %v1106
        %v1171 = vadd.f32 %v976, %v1107
        %v1172 = vadd.f32 %v977, %v1108
        %v1173 = vadd.f32 %v978, %v1109
        %v1174 = vadd.f32 %v979, %v1110
        %v1175 = vadd.f32 %v980, %v1111
        %v1176 = vadd.f32 %v981, %v1112
        %v1177 = vadd.f32 %v982, %v1113
        %v1178 = vadd.f32 %v983, %v1114
        %v1179 = vadd.f32 %v984, %v1115
        %v1180 = vadd.f32 %v985, %v1116
        %v1181 = vadd.f32 %v986, %v1117
        %v1182 = vadd.f32 %v987, %v1118
        %v1183 = vadd.f32 %v988, %v1119
        %v1184 = vadd.f32 %v989, %v1120
        %v1185 = vadd.f32 %v990, %v1121
        %v1186 = vadd.f32 %v991, %v1122
        %v1187 = vadd.f32 %v992, %v1123
        %v1188 = vadd.f32 %v993, %v1124
        %v1189 = vadd.f32 %v994, %v1125
        %v1190 = vadd.f32 %v995, %v1126
        %v1191 = vadd.f32 %v996, %v1127
        %v1192 = vadd.f32 %v997, %v1128
        %v1193 = vadd.f32 %v998, %v1129
        %v1194 = vadd.f32 %v999, %v1130
        %v1195 = vadd.f32 %v1000, %v1131
        %v1196 = vadd.f32 %v1001, %v1132
        %v1197 = vadd.f32 %v1002, %v1133
        %v1198 = vadd.f32 %v1003, %v1134
        %v1199 = vadd.f32 %v1004, %v1135
        %v1200 = vadd.f32 %v1005, %v1136
        %v1201 = vadd.f32 %v1006, %v1137
        %v1202 = vadd.f32 %v1007, %v1138
        %v1203 = vadd.f32 %v1008, %v1139
        %v1204 = vadd.f32 %v1009, %v1140
        %v1205 = vadd.f32 %v1010, %v1141
        %v1206 = vadd.f32 %v1011, %v1142
        %v1207 = vadd.f32 %v1012, %v1143
        %v1208 = vadd.f32 %v1013, %v1144
        %v1209 = vadd.f32 %v1014, %v1145
        %v1210 = vadd.f32 %v1015, %v1146
        %v1211 = vadd.f32 %v1016, %v1147
        %v1212 = vadd.f32 %v1017, %v1148
        %v1213 = vadd.f32 %v1018, %v1149
        %v1214 = vadd.f32 %v1019, %v1150
        %v1215 = vadd.f32 %v1020, %v1151
        %v1216 = vadd.f32 %v1021, %v1152
        %v1217 = vadd.f32 %v1022, %v1153
        %v1218 = vadd.f32 %v1023, %v1154
        %v1219 = vadd.f32 %v1024, %v1155
        %v1220 = vadd.f32 %v1025, %v1156
        %v1221 = vadd.f32 %v1026, %v1157
        %v1222 = vadd.f32 %v1027, %v1158
        %v1223 = vadd.f32 %v1028, %v1159
        %v1224 = vadd.f32 %v1029, %v1160
        %v1225 = vadd.f32 %v1030, %v1161
        %v1226 = vadd.f32 %v1031, %v1162
        %v1227 = vadd.f32 %v1032, %v1163
        %v1228 = vadd.f32 %v1033, %v1164
        %v1229 = vadd.f32 %v1034, %v1165
        %v1230 = vadd.f32 %v1035, %v1166
        %s1231 = sld [smem:[#allocation2 + $0x4]]
        %s1232 = scalar_lea.vmem %s338, 2048 [#allocation9]
        %v1233 = vld [vmem:[%s1232] sm:$0xff]
        %v1234 = vld [vmem:[%s1232 + $0x8] sm:$0xff]
        %v1235 = vld [vmem:[%s1232 + $0x10] sm:$0xff]
        %v1236 = vld [vmem:[%s1232 + $0x18] sm:$0xff]
        %v1237 = vld [vmem:[%s1232 + $0x20] sm:$0xff]
        %v1238 = vld [vmem:[%s1232 + $0x28] sm:$0xff]
        %v1239 = vld [vmem:[%s1232 + $0x30] sm:$0xff]
        %v1240 = vld [vmem:[%s1232 + $0x38] sm:$0xff]
        %v1241 = vld [vmem:[%s1232 + $0x40] sm:$0xff]
        %v1242 = vld [vmem:[%s1232 + $0x48] sm:$0xff]
        %v1243 = vld [vmem:[%s1232 + $0x50] sm:$0xff]
        %v1244 = vld [vmem:[%s1232 + $0x58] sm:$0xff]
        %v1245 = vld [vmem:[%s1232 + $0x60] sm:$0xff]
        %v1246 = vld [vmem:[%s1232 + $0x68] sm:$0xff]
        %v1247 = vld [vmem:[%s1232 + $0x70] sm:$0xff]
        %v1248 = vld [vmem:[%s1232 + $0x78] sm:$0xff]
        %v1249 = vld [vmem:[%s1232 + $0x80] sm:$0xff]
        %v1250 = vld [vmem:[%s1232 + $0x88] sm:$0xff]
        %v1251 = vld [vmem:[%s1232 + $0x90] sm:$0xff]
        %v1252 = vld [vmem:[%s1232 + $0x98] sm:$0xff]
        %v1253 = vld [vmem:[%s1232 + $0xa0] sm:$0xff]
        %v1254 = vld [vmem:[%s1232 + $0xa8] sm:$0xff]
        %v1255 = vld [vmem:[%s1232 + $0xb0] sm:$0xff]
        %v1256 = vld [vmem:[%s1232 + $0xb8] sm:$0xff]
        %v1257 = vld [vmem:[%s1232 + $0xc0] sm:$0xff]
        %v1258 = vld [vmem:[%s1232 + $0xc8] sm:$0xff]
        %v1259 = vld [vmem:[%s1232 + $0xd0] sm:$0xff]
        %v1260 = vld [vmem:[%s1232 + $0xd8] sm:$0xff]
        %v1261 = vld [vmem:[%s1232 + $0xe0] sm:$0xff]
        %v1262 = vld [vmem:[%s1232 + $0xe8] sm:$0xff]
        %v1263 = vld [vmem:[%s1232 + $0xf0] sm:$0xff]
        %v1264 = vld [vmem:[%s1232 + $0xf8] sm:$0xff]
        %v1265 = vld [vmem:[%s1232 + $0x100] sm:$0xff]
        %v1266 = vld [vmem:[%s1232 + $0x108] sm:$0xff]
        %v1267 = vld [vmem:[%s1232 + $0x110] sm:$0xff]
        %v1268 = vld [vmem:[%s1232 + $0x118] sm:$0xff]
        %v1269 = vld [vmem:[%s1232 + $0x120] sm:$0xff]
        %v1270 = vld [vmem:[%s1232 + $0x128] sm:$0xff]
        %v1271 = vld [vmem:[%s1232 + $0x130] sm:$0xff]
        %v1272 = vld [vmem:[%s1232 + $0x138] sm:$0xff]
        %v1273 = vld [vmem:[%s1232 + $0x140] sm:$0xff]
        %v1274 = vld [vmem:[%s1232 + $0x148] sm:$0xff]
        %v1275 = vld [vmem:[%s1232 + $0x150] sm:$0xff]
        %v1276 = vld [vmem:[%s1232 + $0x158] sm:$0xff]
        %v1277 = vld [vmem:[%s1232 + $0x160] sm:$0xff]
        %v1278 = vld [vmem:[%s1232 + $0x168] sm:$0xff]
        %v1279 = vld [vmem:[%s1232 + $0x170] sm:$0xff]
        %v1280 = vld [vmem:[%s1232 + $0x178] sm:$0xff]
        %v1281 = vld [vmem:[%s1232 + $0x180] sm:$0xff]
        %v1282 = vld [vmem:[%s1232 + $0x188] sm:$0xff]
        %v1283 = vld [vmem:[%s1232 + $0x190] sm:$0xff]
        %v1284 = vld [vmem:[%s1232 + $0x198] sm:$0xff]
        %v1285 = vld [vmem:[%s1232 + $0x1a0] sm:$0xff]
        %v1286 = vld [vmem:[%s1232 + $0x1a8] sm:$0xff]
        %v1287 = vld [vmem:[%s1232 + $0x1b0] sm:$0xff]
        %v1288 = vld [vmem:[%s1232 + $0x1b8] sm:$0xff]
        %v1289 = vld [vmem:[%s1232 + $0x1c0] sm:$0xff]
        %v1290 = vld [vmem:[%s1232 + $0x1c8] sm:$0xff]
        %v1291 = vld [vmem:[%s1232 + $0x1d0] sm:$0xff]
        %v1292 = vld [vmem:[%s1232 + $0x1d8] sm:$0xff]
        %v1293 = vld [vmem:[%s1232 + $0x1e0] sm:$0xff]
        %v1294 = vld [vmem:[%s1232 + $0x1e8] sm:$0xff]
        %v1295 = vld [vmem:[%s1232 + $0x1f0] sm:$0xff]
        %v1296 = vld [vmem:[%s1232 + $0x1f8] sm:$0xff]
        %v1297 = vstv %s1231
        %v1298 = vmul.f32 %v1297, %v1233
        %v1299 = vmul.f32 %v1297, %v1234
        %v1300 = vmul.f32 %v1297, %v1235
        %v1301 = vmul.f32 %v1297, %v1236
        %v1302 = vmul.f32 %v1297, %v1237
        %v1303 = vmul.f32 %v1297, %v1238
        %v1304 = vmul.f32 %v1297, %v1239
        %v1305 = vmul.f32 %v1297, %v1240
        %v1306 = vmul.f32 %v1297, %v1241
        %v1307 = vmul.f32 %v1297, %v1242
        %v1308 = vmul.f32 %v1297, %v1243
        %v1309 = vmul.f32 %v1297, %v1244
        %v1310 = vmul.f32 %v1297, %v1245
        %v1311 = vmul.f32 %v1297, %v1246
        %v1312 = vmul.f32 %v1297, %v1247
        %v1313 = vmul.f32 %v1297, %v1248
        %v1314 = vmul.f32 %v1297, %v1249
        %v1315 = vmul.f32 %v1297, %v1250
        %v1316 = vmul.f32 %v1297, %v1251
        %v1317 = vmul.f32 %v1297, %v1252
        %v1318 = vmul.f32 %v1297, %v1253
        %v1319 = vmul.f32 %v1297, %v1254
        %v1320 = vmul.f32 %v1297, %v1255
        %v1321 = vmul.f32 %v1297, %v1256
        %v1322 = vmul.f32 %v1297, %v1257
        %v1323 = vmul.f32 %v1297, %v1258
        %v1324 = vmul.f32 %v1297, %v1259
        %v1325 = vmul.f32 %v1297, %v1260
        %v1326 = vmul.f32 %v1297, %v1261
        %v1327 = vmul.f32 %v1297, %v1262
        %v1328 = vmul.f32 %v1297, %v1263
        %v1329 = vmul.f32 %v1297, %v1264
        %v1330 = vmul.f32 %v1297, %v1265
        %v1331 = vmul.f32 %v1297, %v1266
        %v1332 = vmul.f32 %v1297, %v1267
        %v1333 = vmul.f32 %v1297, %v1268
        %v1334 = vmul.f32 %v1297, %v1269
        %v1335 = vmul.f32 %v1297, %v1270
        %v1336 = vmul.f32 %v1297, %v1271
        %v1337 = vmul.f32 %v1297, %v1272
        %v1338 = vmul.f32 %v1297, %v1273
        %v1339 = vmul.f32 %v1297, %v1274
        %v1340 = vmul.f32 %v1297, %v1275
        %v1341 = vmul.f32 %v1297, %v1276
        %v1342 = vmul.f32 %v1297, %v1277
        %v1343 = vmul.f32 %v1297, %v1278
        %v1344 = vmul.f32 %v1297, %v1279
        %v1345 = vmul.f32 %v1297, %v1280
        %v1346 = vmul.f32 %v1297, %v1281
        %v1347 = vmul.f32 %v1297, %v1282
        %v1348 = vmul.f32 %v1297, %v1283
        %v1349 = vmul.f32 %v1297, %v1284
        %v1350 = vmul.f32 %v1297, %v1285
        %v1351 = vmul.f32 %v1297, %v1286
        %v1352 = vmul.f32 %v1297, %v1287
        %v1353 = vmul.f32 %v1297, %v1288
        %v1354 = vmul.f32 %v1297, %v1289
        %v1355 = vmul.f32 %v1297, %v1290
        %v1356 = vmul.f32 %v1297, %v1291
        %v1357 = vmul.f32 %v1297, %v1292
        %v1358 = vmul.f32 %v1297, %v1293
        %v1359 = vmul.f32 %v1297, %v1294
        %v1360 = vmul.f32 %v1297, %v1295
        %v1361 = vmul.f32 %v1297, %v1296
        %v1362 = vadd.f32 %v1167, %v1298
        %v1363 = vadd.f32 %v1168, %v1299
        %v1364 = vadd.f32 %v1169, %v1300
        %v1365 = vadd.f32 %v1170, %v1301
        %v1366 = vadd.f32 %v1171, %v1302
        %v1367 = vadd.f32 %v1172, %v1303
        %v1368 = vadd.f32 %v1173, %v1304
        %v1369 = vadd.f32 %v1174, %v1305
        %v1370 = vadd.f32 %v1175, %v1306
        %v1371 = vadd.f32 %v1176, %v1307
        %v1372 = vadd.f32 %v1177, %v1308
        %v1373 = vadd.f32 %v1178, %v1309
        %v1374 = vadd.f32 %v1179, %v1310
        %v1375 = vadd.f32 %v1180, %v1311
        %v1376 = vadd.f32 %v1181, %v1312
        %v1377 = vadd.f32 %v1182, %v1313
        %v1378 = vadd.f32 %v1183, %v1314
        %v1379 = vadd.f32 %v1184, %v1315
        %v1380 = vadd.f32 %v1185, %v1316
        %v1381 = vadd.f32 %v1186, %v1317
        %v1382 = vadd.f32 %v1187, %v1318
        %v1383 = vadd.f32 %v1188, %v1319
        %v1384 = vadd.f32 %v1189, %v1320
        %v1385 = vadd.f32 %v1190, %v1321
        %v1386 = vadd.f32 %v1191, %v1322
        %v1387 = vadd.f32 %v1192, %v1323
        %v1388 = vadd.f32 %v1193, %v1324
        %v1389 = vadd.f32 %v1194, %v1325
        %v1390 = vadd.f32 %v1195, %v1326
        %v1391 = vadd.f32 %v1196, %v1327
        %v1392 = vadd.f32 %v1197, %v1328
        %v1393 = vadd.f32 %v1198, %v1329
        %v1394 = vadd.f32 %v1199, %v1330
        %v1395 = vadd.f32 %v1200, %v1331
        %v1396 = vadd.f32 %v1201, %v1332
        %v1397 = vadd.f32 %v1202, %v1333
        %v1398 = vadd.f32 %v1203, %v1334
        %v1399 = vadd.f32 %v1204, %v1335
        %v1400 = vadd.f32 %v1205, %v1336
        %v1401 = vadd.f32 %v1206, %v1337
        %v1402 = vadd.f32 %v1207, %v1338
        %v1403 = vadd.f32 %v1208, %v1339
        %v1404 = vadd.f32 %v1209, %v1340
        %v1405 = vadd.f32 %v1210, %v1341
        %v1406 = vadd.f32 %v1211, %v1342
        %v1407 = vadd.f32 %v1212, %v1343
        %v1408 = vadd.f32 %v1213, %v1344
        %v1409 = vadd.f32 %v1214, %v1345
        %v1410 = vadd.f32 %v1215, %v1346
        %v1411 = vadd.f32 %v1216, %v1347
        %v1412 = vadd.f32 %v1217, %v1348
        %v1413 = vadd.f32 %v1218, %v1349
        %v1414 = vadd.f32 %v1219, %v1350
        %v1415 = vadd.f32 %v1220, %v1351
        %v1416 = vadd.f32 %v1221, %v1352
        %v1417 = vadd.f32 %v1222, %v1353
        %v1418 = vadd.f32 %v1223, %v1354
        %v1419 = vadd.f32 %v1224, %v1355
        %v1420 = vadd.f32 %v1225, %v1356
        %v1421 = vadd.f32 %v1226, %v1357
        %v1422 = vadd.f32 %v1227, %v1358
        %v1423 = vadd.f32 %v1228, %v1359
        %v1424 = vadd.f32 %v1229, %v1360
        %v1425 = vadd.f32 %v1230, %v1361
        %s1426 = sld [smem:[#allocation2 + $0x5]]
        %s1427 = scalar_lea.vmem %s338, 2560 [#allocation9]
        %v1428 = vld [vmem:[%s1427] sm:$0xff]
        %v1429 = vld [vmem:[%s1427 + $0x8] sm:$0xff]
        %v1430 = vld [vmem:[%s1427 + $0x10] sm:$0xff]
        %v1431 = vld [vmem:[%s1427 + $0x18] sm:$0xff]
        %v1432 = vld [vmem:[%s1427 + $0x20] sm:$0xff]
        %v1433 = vld [vmem:[%s1427 + $0x28] sm:$0xff]
        %v1434 = vld [vmem:[%s1427 + $0x30] sm:$0xff]
        %v1435 = vld [vmem:[%s1427 + $0x38] sm:$0xff]
        %v1436 = vld [vmem:[%s1427 + $0x40] sm:$0xff]
        %v1437 = vld [vmem:[%s1427 + $0x48] sm:$0xff]
        %v1438 = vld [vmem:[%s1427 + $0x50] sm:$0xff]
        %v1439 = vld [vmem:[%s1427 + $0x58] sm:$0xff]
        %v1440 = vld [vmem:[%s1427 + $0x60] sm:$0xff]
        %v1441 = vld [vmem:[%s1427 + $0x68] sm:$0xff]
        %v1442 = vld [vmem:[%s1427 + $0x70] sm:$0xff]
        %v1443 = vld [vmem:[%s1427 + $0x78] sm:$0xff]
        %v1444 = vld [vmem:[%s1427 + $0x80] sm:$0xff]
        %v1445 = vld [vmem:[%s1427 + $0x88] sm:$0xff]
        %v1446 = vld [vmem:[%s1427 + $0x90] sm:$0xff]
        %v1447 = vld [vmem:[%s1427 + $0x98] sm:$0xff]
        %v1448 = vld [vmem:[%s1427 + $0xa0] sm:$0xff]
        %v1449 = vld [vmem:[%s1427 + $0xa8] sm:$0xff]
        %v1450 = vld [vmem:[%s1427 + $0xb0] sm:$0xff]
        %v1451 = vld [vmem:[%s1427 + $0xb8] sm:$0xff]
        %v1452 = vld [vmem:[%s1427 + $0xc0] sm:$0xff]
        %v1453 = vld [vmem:[%s1427 + $0xc8] sm:$0xff]
        %v1454 = vld [vmem:[%s1427 + $0xd0] sm:$0xff]
        %v1455 = vld [vmem:[%s1427 + $0xd8] sm:$0xff]
        %v1456 = vld [vmem:[%s1427 + $0xe0] sm:$0xff]
        %v1457 = vld [vmem:[%s1427 + $0xe8] sm:$0xff]
        %v1458 = vld [vmem:[%s1427 + $0xf0] sm:$0xff]
        %v1459 = vld [vmem:[%s1427 + $0xf8] sm:$0xff]
        %v1460 = vld [vmem:[%s1427 + $0x100] sm:$0xff]
        %v1461 = vld [vmem:[%s1427 + $0x108] sm:$0xff]
        %v1462 = vld [vmem:[%s1427 + $0x110] sm:$0xff]
        %v1463 = vld [vmem:[%s1427 + $0x118] sm:$0xff]
        %v1464 = vld [vmem:[%s1427 + $0x120] sm:$0xff]
        %v1465 = vld [vmem:[%s1427 + $0x128] sm:$0xff]
        %v1466 = vld [vmem:[%s1427 + $0x130] sm:$0xff]
        %v1467 = vld [vmem:[%s1427 + $0x138] sm:$0xff]
        %v1468 = vld [vmem:[%s1427 + $0x140] sm:$0xff]
        %v1469 = vld [vmem:[%s1427 + $0x148] sm:$0xff]
        %v1470 = vld [vmem:[%s1427 + $0x150] sm:$0xff]
        %v1471 = vld [vmem:[%s1427 + $0x158] sm:$0xff]
        %v1472 = vld [vmem:[%s1427 + $0x160] sm:$0xff]
        %v1473 = vld [vmem:[%s1427 + $0x168] sm:$0xff]
        %v1474 = vld [vmem:[%s1427 + $0x170] sm:$0xff]
        %v1475 = vld [vmem:[%s1427 + $0x178] sm:$0xff]
        %v1476 = vld [vmem:[%s1427 + $0x180] sm:$0xff]
        %v1477 = vld [vmem:[%s1427 + $0x188] sm:$0xff]
        %v1478 = vld [vmem:[%s1427 + $0x190] sm:$0xff]
        %v1479 = vld [vmem:[%s1427 + $0x198] sm:$0xff]
        %v1480 = vld [vmem:[%s1427 + $0x1a0] sm:$0xff]
        %v1481 = vld [vmem:[%s1427 + $0x1a8] sm:$0xff]
        %v1482 = vld [vmem:[%s1427 + $0x1b0] sm:$0xff]
        %v1483 = vld [vmem:[%s1427 + $0x1b8] sm:$0xff]
        %v1484 = vld [vmem:[%s1427 + $0x1c0] sm:$0xff]
        %v1485 = vld [vmem:[%s1427 + $0x1c8] sm:$0xff]
        %v1486 = vld [vmem:[%s1427 + $0x1d0] sm:$0xff]
        %v1487 = vld [vmem:[%s1427 + $0x1d8] sm:$0xff]
        %v1488 = vld [vmem:[%s1427 + $0x1e0] sm:$0xff]
        %v1489 = vld [vmem:[%s1427 + $0x1e8] sm:$0xff]
        %v1490 = vld [vmem:[%s1427 + $0x1f0] sm:$0xff]
        %v1491 = vld [vmem:[%s1427 + $0x1f8] sm:$0xff]
        %v1492 = vstv %s1426
        %v1493 = vmul.f32 %v1492, %v1428
        %v1494 = vmul.f32 %v1492, %v1429
        %v1495 = vmul.f32 %v1492, %v1430
        %v1496 = vmul.f32 %v1492, %v1431
        %v1497 = vmul.f32 %v1492, %v1432
        %v1498 = vmul.f32 %v1492, %v1433
        %v1499 = vmul.f32 %v1492, %v1434
        %v1500 = vmul.f32 %v1492, %v1435
        %v1501 = vmul.f32 %v1492, %v1436
        %v1502 = vmul.f32 %v1492, %v1437
        %v1503 = vmul.f32 %v1492, %v1438
        %v1504 = vmul.f32 %v1492, %v1439
        %v1505 = vmul.f32 %v1492, %v1440
        %v1506 = vmul.f32 %v1492, %v1441
        %v1507 = vmul.f32 %v1492, %v1442
        %v1508 = vmul.f32 %v1492, %v1443
        %v1509 = vmul.f32 %v1492, %v1444
        %v1510 = vmul.f32 %v1492, %v1445
        %v1511 = vmul.f32 %v1492, %v1446
        %v1512 = vmul.f32 %v1492, %v1447
        %v1513 = vmul.f32 %v1492, %v1448
        %v1514 = vmul.f32 %v1492, %v1449
        %v1515 = vmul.f32 %v1492, %v1450
        %v1516 = vmul.f32 %v1492, %v1451
        %v1517 = vmul.f32 %v1492, %v1452
        %v1518 = vmul.f32 %v1492, %v1453
        %v1519 = vmul.f32 %v1492, %v1454
        %v1520 = vmul.f32 %v1492, %v1455
        %v1521 = vmul.f32 %v1492, %v1456
        %v1522 = vmul.f32 %v1492, %v1457
        %v1523 = vmul.f32 %v1492, %v1458
        %v1524 = vmul.f32 %v1492, %v1459
        %v1525 = vmul.f32 %v1492, %v1460
        %v1526 = vmul.f32 %v1492, %v1461
        %v1527 = vmul.f32 %v1492, %v1462
        %v1528 = vmul.f32 %v1492, %v1463
        %v1529 = vmul.f32 %v1492, %v1464
        %v1530 = vmul.f32 %v1492, %v1465
        %v1531 = vmul.f32 %v1492, %v1466
        %v1532 = vmul.f32 %v1492, %v1467
        %v1533 = vmul.f32 %v1492, %v1468
        %v1534 = vmul.f32 %v1492, %v1469
        %v1535 = vmul.f32 %v1492, %v1470
        %v1536 = vmul.f32 %v1492, %v1471
        %v1537 = vmul.f32 %v1492, %v1472
        %v1538 = vmul.f32 %v1492, %v1473
        %v1539 = vmul.f32 %v1492, %v1474
        %v1540 = vmul.f32 %v1492, %v1475
        %v1541 = vmul.f32 %v1492, %v1476
        %v1542 = vmul.f32 %v1492, %v1477
        %v1543 = vmul.f32 %v1492, %v1478
        %v1544 = vmul.f32 %v1492, %v1479
        %v1545 = vmul.f32 %v1492, %v1480
        %v1546 = vmul.f32 %v1492, %v1481
        %v1547 = vmul.f32 %v1492, %v1482
        %v1548 = vmul.f32 %v1492, %v1483
        %v1549 = vmul.f32 %v1492, %v1484
        %v1550 = vmul.f32 %v1492, %v1485
        %v1551 = vmul.f32 %v1492, %v1486
        %v1552 = vmul.f32 %v1492, %v1487
        %v1553 = vmul.f32 %v1492, %v1488
        %v1554 = vmul.f32 %v1492, %v1489
        %v1555 = vmul.f32 %v1492, %v1490
        %v1556 = vmul.f32 %v1492, %v1491
        %v1557 = vadd.f32 %v1362, %v1493
        %v1558 = vadd.f32 %v1363, %v1494
        %v1559 = vadd.f32 %v1364, %v1495
        %v1560 = vadd.f32 %v1365, %v1496
        %v1561 = vadd.f32 %v1366, %v1497
        %v1562 = vadd.f32 %v1367, %v1498
        %v1563 = vadd.f32 %v1368, %v1499
        %v1564 = vadd.f32 %v1369, %v1500
        %v1565 = vadd.f32 %v1370, %v1501
        %v1566 = vadd.f32 %v1371, %v1502
        %v1567 = vadd.f32 %v1372, %v1503
        %v1568 = vadd.f32 %v1373, %v1504
        %v1569 = vadd.f32 %v1374, %v1505
        %v1570 = vadd.f32 %v1375, %v1506
        %v1571 = vadd.f32 %v1376, %v1507
        %v1572 = vadd.f32 %v1377, %v1508
        %v1573 = vadd.f32 %v1378, %v1509
        %v1574 = vadd.f32 %v1379, %v1510
        %v1575 = vadd.f32 %v1380, %v1511
        %v1576 = vadd.f32 %v1381, %v1512
        %v1577 = vadd.f32 %v1382, %v1513
        %v1578 = vadd.f32 %v1383, %v1514
        %v1579 = vadd.f32 %v1384, %v1515
        %v1580 = vadd.f32 %v1385, %v1516
        %v1581 = vadd.f32 %v1386, %v1517
        %v1582 = vadd.f32 %v1387, %v1518
        %v1583 = vadd.f32 %v1388, %v1519
        %v1584 = vadd.f32 %v1389, %v1520
        %v1585 = vadd.f32 %v1390, %v1521
        %v1586 = vadd.f32 %v1391, %v1522
        %v1587 = vadd.f32 %v1392, %v1523
        %v1588 = vadd.f32 %v1393, %v1524
        %v1589 = vadd.f32 %v1394, %v1525
        %v1590 = vadd.f32 %v1395, %v1526
        %v1591 = vadd.f32 %v1396, %v1527
        %v1592 = vadd.f32 %v1397, %v1528
        %v1593 = vadd.f32 %v1398, %v1529
        %v1594 = vadd.f32 %v1399, %v1530
        %v1595 = vadd.f32 %v1400, %v1531
        %v1596 = vadd.f32 %v1401, %v1532
        %v1597 = vadd.f32 %v1402, %v1533
        %v1598 = vadd.f32 %v1403, %v1534
        %v1599 = vadd.f32 %v1404, %v1535
        %v1600 = vadd.f32 %v1405, %v1536
        %v1601 = vadd.f32 %v1406, %v1537
        %v1602 = vadd.f32 %v1407, %v1538
        %v1603 = vadd.f32 %v1408, %v1539
        %v1604 = vadd.f32 %v1409, %v1540
        %v1605 = vadd.f32 %v1410, %v1541
        %v1606 = vadd.f32 %v1411, %v1542
        %v1607 = vadd.f32 %v1412, %v1543
        %v1608 = vadd.f32 %v1413, %v1544
        %v1609 = vadd.f32 %v1414, %v1545
        %v1610 = vadd.f32 %v1415, %v1546
        %v1611 = vadd.f32 %v1416, %v1547
        %v1612 = vadd.f32 %v1417, %v1548
        %v1613 = vadd.f32 %v1418, %v1549
        %v1614 = vadd.f32 %v1419, %v1550
        %v1615 = vadd.f32 %v1420, %v1551
        %v1616 = vadd.f32 %v1421, %v1552
        %v1617 = vadd.f32 %v1422, %v1553
        %v1618 = vadd.f32 %v1423, %v1554
        %v1619 = vadd.f32 %v1424, %v1555
        %v1620 = vadd.f32 %v1425, %v1556
        %s1621 = sld [smem:[#allocation2 + $0x6]]
        %s1622 = scalar_lea.vmem %s338, 3072 [#allocation9]
        %v1623 = vld [vmem:[%s1622] sm:$0xff]
        %v1624 = vld [vmem:[%s1622 + $0x8] sm:$0xff]
        %v1625 = vld [vmem:[%s1622 + $0x10] sm:$0xff]
        %v1626 = vld [vmem:[%s1622 + $0x18] sm:$0xff]
        %v1627 = vld [vmem:[%s1622 + $0x20] sm:$0xff]
        %v1628 = vld [vmem:[%s1622 + $0x28] sm:$0xff]
        %v1629 = vld [vmem:[%s1622 + $0x30] sm:$0xff]
        %v1630 = vld [vmem:[%s1622 + $0x38] sm:$0xff]
        %v1631 = vld [vmem:[%s1622 + $0x40] sm:$0xff]
        %v1632 = vld [vmem:[%s1622 + $0x48] sm:$0xff]
        %v1633 = vld [vmem:[%s1622 + $0x50] sm:$0xff]
        %v1634 = vld [vmem:[%s1622 + $0x58] sm:$0xff]
        %v1635 = vld [vmem:[%s1622 + $0x60] sm:$0xff]
        %v1636 = vld [vmem:[%s1622 + $0x68] sm:$0xff]
        %v1637 = vld [vmem:[%s1622 + $0x70] sm:$0xff]
        %v1638 = vld [vmem:[%s1622 + $0x78] sm:$0xff]
        %v1639 = vld [vmem:[%s1622 + $0x80] sm:$0xff]
        %v1640 = vld [vmem:[%s1622 + $0x88] sm:$0xff]
        %v1641 = vld [vmem:[%s1622 + $0x90] sm:$0xff]
        %v1642 = vld [vmem:[%s1622 + $0x98] sm:$0xff]
        %v1643 = vld [vmem:[%s1622 + $0xa0] sm:$0xff]
        %v1644 = vld [vmem:[%s1622 + $0xa8] sm:$0xff]
        %v1645 = vld [vmem:[%s1622 + $0xb0] sm:$0xff]
        %v1646 = vld [vmem:[%s1622 + $0xb8] sm:$0xff]
        %v1647 = vld [vmem:[%s1622 + $0xc0] sm:$0xff]
        %v1648 = vld [vmem:[%s1622 + $0xc8] sm:$0xff]
        %v1649 = vld [vmem:[%s1622 + $0xd0] sm:$0xff]
        %v1650 = vld [vmem:[%s1622 + $0xd8] sm:$0xff]
        %v1651 = vld [vmem:[%s1622 + $0xe0] sm:$0xff]
        %v1652 = vld [vmem:[%s1622 + $0xe8] sm:$0xff]
        %v1653 = vld [vmem:[%s1622 + $0xf0] sm:$0xff]
        %v1654 = vld [vmem:[%s1622 + $0xf8] sm:$0xff]
        %v1655 = vld [vmem:[%s1622 + $0x100] sm:$0xff]
        %v1656 = vld [vmem:[%s1622 + $0x108] sm:$0xff]
        %v1657 = vld [vmem:[%s1622 + $0x110] sm:$0xff]
        %v1658 = vld [vmem:[%s1622 + $0x118] sm:$0xff]
        %v1659 = vld [vmem:[%s1622 + $0x120] sm:$0xff]
        %v1660 = vld [vmem:[%s1622 + $0x128] sm:$0xff]
        %v1661 = vld [vmem:[%s1622 + $0x130] sm:$0xff]
        %v1662 = vld [vmem:[%s1622 + $0x138] sm:$0xff]
        %v1663 = vld [vmem:[%s1622 + $0x140] sm:$0xff]
        %v1664 = vld [vmem:[%s1622 + $0x148] sm:$0xff]
        %v1665 = vld [vmem:[%s1622 + $0x150] sm:$0xff]
        %v1666 = vld [vmem:[%s1622 + $0x158] sm:$0xff]
        %v1667 = vld [vmem:[%s1622 + $0x160] sm:$0xff]
        %v1668 = vld [vmem:[%s1622 + $0x168] sm:$0xff]
        %v1669 = vld [vmem:[%s1622 + $0x170] sm:$0xff]
        %v1670 = vld [vmem:[%s1622 + $0x178] sm:$0xff]
        %v1671 = vld [vmem:[%s1622 + $0x180] sm:$0xff]
        %v1672 = vld [vmem:[%s1622 + $0x188] sm:$0xff]
        %v1673 = vld [vmem:[%s1622 + $0x190] sm:$0xff]
        %v1674 = vld [vmem:[%s1622 + $0x198] sm:$0xff]
        %v1675 = vld [vmem:[%s1622 + $0x1a0] sm:$0xff]
        %v1676 = vld [vmem:[%s1622 + $0x1a8] sm:$0xff]
        %v1677 = vld [vmem:[%s1622 + $0x1b0] sm:$0xff]
        %v1678 = vld [vmem:[%s1622 + $0x1b8] sm:$0xff]
        %v1679 = vld [vmem:[%s1622 + $0x1c0] sm:$0xff]
        %v1680 = vld [vmem:[%s1622 + $0x1c8] sm:$0xff]
        %v1681 = vld [vmem:[%s1622 + $0x1d0] sm:$0xff]
        %v1682 = vld [vmem:[%s1622 + $0x1d8] sm:$0xff]
        %v1683 = vld [vmem:[%s1622 + $0x1e0] sm:$0xff]
        %v1684 = vld [vmem:[%s1622 + $0x1e8] sm:$0xff]
        %v1685 = vld [vmem:[%s1622 + $0x1f0] sm:$0xff]
        %v1686 = vld [vmem:[%s1622 + $0x1f8] sm:$0xff]
        %v1687 = vstv %s1621
        %v1688 = vmul.f32 %v1687, %v1623
        %v1689 = vmul.f32 %v1687, %v1624
        %v1690 = vmul.f32 %v1687, %v1625
        %v1691 = vmul.f32 %v1687, %v1626
        %v1692 = vmul.f32 %v1687, %v1627
        %v1693 = vmul.f32 %v1687, %v1628
        %v1694 = vmul.f32 %v1687, %v1629
        %v1695 = vmul.f32 %v1687, %v1630
        %v1696 = vmul.f32 %v1687, %v1631
        %v1697 = vmul.f32 %v1687, %v1632
        %v1698 = vmul.f32 %v1687, %v1633
        %v1699 = vmul.f32 %v1687, %v1634
        %v1700 = vmul.f32 %v1687, %v1635
        %v1701 = vmul.f32 %v1687, %v1636
        %v1702 = vmul.f32 %v1687, %v1637
        %v1703 = vmul.f32 %v1687, %v1638
        %v1704 = vmul.f32 %v1687, %v1639
        %v1705 = vmul.f32 %v1687, %v1640
        %v1706 = vmul.f32 %v1687, %v1641
        %v1707 = vmul.f32 %v1687, %v1642
        %v1708 = vmul.f32 %v1687, %v1643
        %v1709 = vmul.f32 %v1687, %v1644
        %v1710 = vmul.f32 %v1687, %v1645
        %v1711 = vmul.f32 %v1687, %v1646
        %v1712 = vmul.f32 %v1687, %v1647
        %v1713 = vmul.f32 %v1687, %v1648
        %v1714 = vmul.f32 %v1687, %v1649
        %v1715 = vmul.f32 %v1687, %v1650
        %v1716 = vmul.f32 %v1687, %v1651
        %v1717 = vmul.f32 %v1687, %v1652
        %v1718 = vmul.f32 %v1687, %v1653
        %v1719 = vmul.f32 %v1687, %v1654
        %v1720 = vmul.f32 %v1687, %v1655
        %v1721 = vmul.f32 %v1687, %v1656
        %v1722 = vmul.f32 %v1687, %v1657
        %v1723 = vmul.f32 %v1687, %v1658
        %v1724 = vmul.f32 %v1687, %v1659
        %v1725 = vmul.f32 %v1687, %v1660
        %v1726 = vmul.f32 %v1687, %v1661
        %v1727 = vmul.f32 %v1687, %v1662
        %v1728 = vmul.f32 %v1687, %v1663
        %v1729 = vmul.f32 %v1687, %v1664
        %v1730 = vmul.f32 %v1687, %v1665
        %v1731 = vmul.f32 %v1687, %v1666
        %v1732 = vmul.f32 %v1687, %v1667
        %v1733 = vmul.f32 %v1687, %v1668
        %v1734 = vmul.f32 %v1687, %v1669
        %v1735 = vmul.f32 %v1687, %v1670
        %v1736 = vmul.f32 %v1687, %v1671
        %v1737 = vmul.f32 %v1687, %v1672
        %v1738 = vmul.f32 %v1687, %v1673
        %v1739 = vmul.f32 %v1687, %v1674
        %v1740 = vmul.f32 %v1687, %v1675
        %v1741 = vmul.f32 %v1687, %v1676
        %v1742 = vmul.f32 %v1687, %v1677
        %v1743 = vmul.f32 %v1687, %v1678
        %v1744 = vmul.f32 %v1687, %v1679
        %v1745 = vmul.f32 %v1687, %v1680
        %v1746 = vmul.f32 %v1687, %v1681
        %v1747 = vmul.f32 %v1687, %v1682
        %v1748 = vmul.f32 %v1687, %v1683
        %v1749 = vmul.f32 %v1687, %v1684
        %v1750 = vmul.f32 %v1687, %v1685
        %v1751 = vmul.f32 %v1687, %v1686
        %v1752 = vadd.f32 %v1557, %v1688
        %v1753 = vadd.f32 %v1558, %v1689
        %v1754 = vadd.f32 %v1559, %v1690
        %v1755 = vadd.f32 %v1560, %v1691
        %v1756 = vadd.f32 %v1561, %v1692
        %v1757 = vadd.f32 %v1562, %v1693
        %v1758 = vadd.f32 %v1563, %v1694
        %v1759 = vadd.f32 %v1564, %v1695
        %v1760 = vadd.f32 %v1565, %v1696
        %v1761 = vadd.f32 %v1566, %v1697
        %v1762 = vadd.f32 %v1567, %v1698
        %v1763 = vadd.f32 %v1568, %v1699
        %v1764 = vadd.f32 %v1569, %v1700
        %v1765 = vadd.f32 %v1570, %v1701
        %v1766 = vadd.f32 %v1571, %v1702
        %v1767 = vadd.f32 %v1572, %v1703
        %v1768 = vadd.f32 %v1573, %v1704
        %v1769 = vadd.f32 %v1574, %v1705
        %v1770 = vadd.f32 %v1575, %v1706
        %v1771 = vadd.f32 %v1576, %v1707
        %v1772 = vadd.f32 %v1577, %v1708
        %v1773 = vadd.f32 %v1578, %v1709
        %v1774 = vadd.f32 %v1579, %v1710
        %v1775 = vadd.f32 %v1580, %v1711
        %v1776 = vadd.f32 %v1581, %v1712
        %v1777 = vadd.f32 %v1582, %v1713
        %v1778 = vadd.f32 %v1583, %v1714
        %v1779 = vadd.f32 %v1584, %v1715
        %v1780 = vadd.f32 %v1585, %v1716
        %v1781 = vadd.f32 %v1586, %v1717
        %v1782 = vadd.f32 %v1587, %v1718
        %v1783 = vadd.f32 %v1588, %v1719
        %v1784 = vadd.f32 %v1589, %v1720
        %v1785 = vadd.f32 %v1590, %v1721
        %v1786 = vadd.f32 %v1591, %v1722
        %v1787 = vadd.f32 %v1592, %v1723
        %v1788 = vadd.f32 %v1593, %v1724
        %v1789 = vadd.f32 %v1594, %v1725
        %v1790 = vadd.f32 %v1595, %v1726
        %v1791 = vadd.f32 %v1596, %v1727
        %v1792 = vadd.f32 %v1597, %v1728
        %v1793 = vadd.f32 %v1598, %v1729
        %v1794 = vadd.f32 %v1599, %v1730
        %v1795 = vadd.f32 %v1600, %v1731
        %v1796 = vadd.f32 %v1601, %v1732
        %v1797 = vadd.f32 %v1602, %v1733
        %v1798 = vadd.f32 %v1603, %v1734
        %v1799 = vadd.f32 %v1604, %v1735
        %v1800 = vadd.f32 %v1605, %v1736
        %v1801 = vadd.f32 %v1606, %v1737
        %v1802 = vadd.f32 %v1607, %v1738
        %v1803 = vadd.f32 %v1608, %v1739
        %v1804 = vadd.f32 %v1609, %v1740
        %v1805 = vadd.f32 %v1610, %v1741
        %v1806 = vadd.f32 %v1611, %v1742
        %v1807 = vadd.f32 %v1612, %v1743
        %v1808 = vadd.f32 %v1613, %v1744
        %v1809 = vadd.f32 %v1614, %v1745
        %v1810 = vadd.f32 %v1615, %v1746
        %v1811 = vadd.f32 %v1616, %v1747
        %v1812 = vadd.f32 %v1617, %v1748
        %v1813 = vadd.f32 %v1618, %v1749
        %v1814 = vadd.f32 %v1619, %v1750
        %v1815 = vadd.f32 %v1620, %v1751
        %s1816 = sld [smem:[#allocation2 + $0x7]]
        %s1817 = scalar_lea.vmem %s338, 3584 [#allocation9]
        %v1818 = vld [vmem:[%s1817] sm:$0xff]
        %v1819 = vld [vmem:[%s1817 + $0x8] sm:$0xff]
        %v1820 = vld [vmem:[%s1817 + $0x10] sm:$0xff]
        %v1821 = vld [vmem:[%s1817 + $0x18] sm:$0xff]
        %v1822 = vld [vmem:[%s1817 + $0x20] sm:$0xff]
        %v1823 = vld [vmem:[%s1817 + $0x28] sm:$0xff]
        %v1824 = vld [vmem:[%s1817 + $0x30] sm:$0xff]
        %v1825 = vld [vmem:[%s1817 + $0x38] sm:$0xff]
        %v1826 = vld [vmem:[%s1817 + $0x40] sm:$0xff]
        %v1827 = vld [vmem:[%s1817 + $0x48] sm:$0xff]
        %v1828 = vld [vmem:[%s1817 + $0x50] sm:$0xff]
        %v1829 = vld [vmem:[%s1817 + $0x58] sm:$0xff]
        %v1830 = vld [vmem:[%s1817 + $0x60] sm:$0xff]
        %v1831 = vld [vmem:[%s1817 + $0x68] sm:$0xff]
        %v1832 = vld [vmem:[%s1817 + $0x70] sm:$0xff]
        %v1833 = vld [vmem:[%s1817 + $0x78] sm:$0xff]
        %v1834 = vld [vmem:[%s1817 + $0x80] sm:$0xff]
        %v1835 = vld [vmem:[%s1817 + $0x88] sm:$0xff]
        %v1836 = vld [vmem:[%s1817 + $0x90] sm:$0xff]
        %v1837 = vld [vmem:[%s1817 + $0x98] sm:$0xff]
        %v1838 = vld [vmem:[%s1817 + $0xa0] sm:$0xff]
        %v1839 = vld [vmem:[%s1817 + $0xa8] sm:$0xff]
        %v1840 = vld [vmem:[%s1817 + $0xb0] sm:$0xff]
        %v1841 = vld [vmem:[%s1817 + $0xb8] sm:$0xff]
        %v1842 = vld [vmem:[%s1817 + $0xc0] sm:$0xff]
        %v1843 = vld [vmem:[%s1817 + $0xc8] sm:$0xff]
        %v1844 = vld [vmem:[%s1817 + $0xd0] sm:$0xff]
        %v1845 = vld [vmem:[%s1817 + $0xd8] sm:$0xff]
        %v1846 = vld [vmem:[%s1817 + $0xe0] sm:$0xff]
        %v1847 = vld [vmem:[%s1817 + $0xe8] sm:$0xff]
        %v1848 = vld [vmem:[%s1817 + $0xf0] sm:$0xff]
        %v1849 = vld [vmem:[%s1817 + $0xf8] sm:$0xff]
        %v1850 = vld [vmem:[%s1817 + $0x100] sm:$0xff]
        %v1851 = vld [vmem:[%s1817 + $0x108] sm:$0xff]
        %v1852 = vld [vmem:[%s1817 + $0x110] sm:$0xff]
        %v1853 = vld [vmem:[%s1817 + $0x118] sm:$0xff]
        %v1854 = vld [vmem:[%s1817 + $0x120] sm:$0xff]
        %v1855 = vld [vmem:[%s1817 + $0x128] sm:$0xff]
        %v1856 = vld [vmem:[%s1817 + $0x130] sm:$0xff]
        %v1857 = vld [vmem:[%s1817 + $0x138] sm:$0xff]
        %v1858 = vld [vmem:[%s1817 + $0x140] sm:$0xff]
        %v1859 = vld [vmem:[%s1817 + $0x148] sm:$0xff]
        %v1860 = vld [vmem:[%s1817 + $0x150] sm:$0xff]
        %v1861 = vld [vmem:[%s1817 + $0x158] sm:$0xff]
        %v1862 = vld [vmem:[%s1817 + $0x160] sm:$0xff]
        %v1863 = vld [vmem:[%s1817 + $0x168] sm:$0xff]
        %v1864 = vld [vmem:[%s1817 + $0x170] sm:$0xff]
        %v1865 = vld [vmem:[%s1817 + $0x178] sm:$0xff]
        %v1866 = vld [vmem:[%s1817 + $0x180] sm:$0xff]
        %v1867 = vld [vmem:[%s1817 + $0x188] sm:$0xff]
        %v1868 = vld [vmem:[%s1817 + $0x190] sm:$0xff]
        %v1869 = vld [vmem:[%s1817 + $0x198] sm:$0xff]
        %v1870 = vld [vmem:[%s1817 + $0x1a0] sm:$0xff]
        %v1871 = vld [vmem:[%s1817 + $0x1a8] sm:$0xff]
        %v1872 = vld [vmem:[%s1817 + $0x1b0] sm:$0xff]
        %v1873 = vld [vmem:[%s1817 + $0x1b8] sm:$0xff]
        %v1874 = vld [vmem:[%s1817 + $0x1c0] sm:$0xff]
        %v1875 = vld [vmem:[%s1817 + $0x1c8] sm:$0xff]
        %v1876 = vld [vmem:[%s1817 + $0x1d0] sm:$0xff]
        %v1877 = vld [vmem:[%s1817 + $0x1d8] sm:$0xff]
        %v1878 = vld [vmem:[%s1817 + $0x1e0] sm:$0xff]
        %v1879 = vld [vmem:[%s1817 + $0x1e8] sm:$0xff]
        %v1880 = vld [vmem:[%s1817 + $0x1f0] sm:$0xff]
        %v1881 = vld [vmem:[%s1817 + $0x1f8] sm:$0xff]
        %v1882 = vstv %s1816
        %v1883 = vmul.f32 %v1882, %v1818
        %v1884 = vmul.f32 %v1882, %v1819
        %v1885 = vmul.f32 %v1882, %v1820
        %v1886 = vmul.f32 %v1882, %v1821
        %v1887 = vmul.f32 %v1882, %v1822
        %v1888 = vmul.f32 %v1882, %v1823
        %v1889 = vmul.f32 %v1882, %v1824
        %v1890 = vmul.f32 %v1882, %v1825
        %v1891 = vmul.f32 %v1882, %v1826
        %v1892 = vmul.f32 %v1882, %v1827
        %v1893 = vmul.f32 %v1882, %v1828
        %v1894 = vmul.f32 %v1882, %v1829
        %v1895 = vmul.f32 %v1882, %v1830
        %v1896 = vmul.f32 %v1882, %v1831
        %v1897 = vmul.f32 %v1882, %v1832
        %v1898 = vmul.f32 %v1882, %v1833
        %v1899 = vmul.f32 %v1882, %v1834
        %v1900 = vmul.f32 %v1882, %v1835
        %v1901 = vmul.f32 %v1882, %v1836
        %v1902 = vmul.f32 %v1882, %v1837
        %v1903 = vmul.f32 %v1882, %v1838
        %v1904 = vmul.f32 %v1882, %v1839
        %v1905 = vmul.f32 %v1882, %v1840
        %v1906 = vmul.f32 %v1882, %v1841
        %v1907 = vmul.f32 %v1882, %v1842
        %v1908 = vmul.f32 %v1882, %v1843
        %v1909 = vmul.f32 %v1882, %v1844
        %v1910 = vmul.f32 %v1882, %v1845
        %v1911 = vmul.f32 %v1882, %v1846
        %v1912 = vmul.f32 %v1882, %v1847
        %v1913 = vmul.f32 %v1882, %v1848
        %v1914 = vmul.f32 %v1882, %v1849
        %v1915 = vmul.f32 %v1882, %v1850
        %v1916 = vmul.f32 %v1882, %v1851
        %v1917 = vmul.f32 %v1882, %v1852
        %v1918 = vmul.f32 %v1882, %v1853
        %v1919 = vmul.f32 %v1882, %v1854
        %v1920 = vmul.f32 %v1882, %v1855
        %v1921 = vmul.f32 %v1882, %v1856
        %v1922 = vmul.f32 %v1882, %v1857
        %v1923 = vmul.f32 %v1882, %v1858
        %v1924 = vmul.f32 %v1882, %v1859
        %v1925 = vmul.f32 %v1882, %v1860
        %v1926 = vmul.f32 %v1882, %v1861
        %v1927 = vmul.f32 %v1882, %v1862
        %v1928 = vmul.f32 %v1882, %v1863
        %v1929 = vmul.f32 %v1882, %v1864
        %v1930 = vmul.f32 %v1882, %v1865
        %v1931 = vmul.f32 %v1882, %v1866
        %v1932 = vmul.f32 %v1882, %v1867
        %v1933 = vmul.f32 %v1882, %v1868
        %v1934 = vmul.f32 %v1882, %v1869
        %v1935 = vmul.f32 %v1882, %v1870
        %v1936 = vmul.f32 %v1882, %v1871
        %v1937 = vmul.f32 %v1882, %v1872
        %v1938 = vmul.f32 %v1882, %v1873
        %v1939 = vmul.f32 %v1882, %v1874
        %v1940 = vmul.f32 %v1882, %v1875
        %v1941 = vmul.f32 %v1882, %v1876
        %v1942 = vmul.f32 %v1882, %v1877
        %v1943 = vmul.f32 %v1882, %v1878
        %v1944 = vmul.f32 %v1882, %v1879
        %v1945 = vmul.f32 %v1882, %v1880
        %v1946 = vmul.f32 %v1882, %v1881
        %v1947 = vadd.f32 %v1752, %v1883
        %v1948 = vadd.f32 %v1753, %v1884
        %v1949 = vadd.f32 %v1754, %v1885
        %v1950 = vadd.f32 %v1755, %v1886
        %v1951 = vadd.f32 %v1756, %v1887
        %v1952 = vadd.f32 %v1757, %v1888
        %v1953 = vadd.f32 %v1758, %v1889
        %v1954 = vadd.f32 %v1759, %v1890
        %v1955 = vadd.f32 %v1760, %v1891
        %v1956 = vadd.f32 %v1761, %v1892
        %v1957 = vadd.f32 %v1762, %v1893
        %v1958 = vadd.f32 %v1763, %v1894
        %v1959 = vadd.f32 %v1764, %v1895
        %v1960 = vadd.f32 %v1765, %v1896
        %v1961 = vadd.f32 %v1766, %v1897
        %v1962 = vadd.f32 %v1767, %v1898
        %v1963 = vadd.f32 %v1768, %v1899
        %v1964 = vadd.f32 %v1769, %v1900
        %v1965 = vadd.f32 %v1770, %v1901
        %v1966 = vadd.f32 %v1771, %v1902
        %v1967 = vadd.f32 %v1772, %v1903
        %v1968 = vadd.f32 %v1773, %v1904
        %v1969 = vadd.f32 %v1774, %v1905
        %v1970 = vadd.f32 %v1775, %v1906
        %v1971 = vadd.f32 %v1776, %v1907
        %v1972 = vadd.f32 %v1777, %v1908
        %v1973 = vadd.f32 %v1778, %v1909
        %v1974 = vadd.f32 %v1779, %v1910
        %v1975 = vadd.f32 %v1780, %v1911
        %v1976 = vadd.f32 %v1781, %v1912
        %v1977 = vadd.f32 %v1782, %v1913
        %v1978 = vadd.f32 %v1783, %v1914
        %v1979 = vadd.f32 %v1784, %v1915
        %v1980 = vadd.f32 %v1785, %v1916
        %v1981 = vadd.f32 %v1786, %v1917
        %v1982 = vadd.f32 %v1787, %v1918
        %v1983 = vadd.f32 %v1788, %v1919
        %v1984 = vadd.f32 %v1789, %v1920
        %v1985 = vadd.f32 %v1790, %v1921
        %v1986 = vadd.f32 %v1791, %v1922
        %v1987 = vadd.f32 %v1792, %v1923
        %v1988 = vadd.f32 %v1793, %v1924
        %v1989 = vadd.f32 %v1794, %v1925
        %v1990 = vadd.f32 %v1795, %v1926
        %v1991 = vadd.f32 %v1796, %v1927
        %v1992 = vadd.f32 %v1797, %v1928
        %v1993 = vadd.f32 %v1798, %v1929
        %v1994 = vadd.f32 %v1799, %v1930
        %v1995 = vadd.f32 %v1800, %v1931
        %v1996 = vadd.f32 %v1801, %v1932
        %v1997 = vadd.f32 %v1802, %v1933
        %v1998 = vadd.f32 %v1803, %v1934
        %v1999 = vadd.f32 %v1804, %v1935
        %v2000 = vadd.f32 %v1805, %v1936
        %v2001 = vadd.f32 %v1806, %v1937
        %v2002 = vadd.f32 %v1807, %v1938
        %v2003 = vadd.f32 %v1808, %v1939
        %v2004 = vadd.f32 %v1809, %v1940
        %v2005 = vadd.f32 %v1810, %v1941
        %v2006 = vadd.f32 %v1811, %v1942
        %v2007 = vadd.f32 %v1812, %v1943
        %v2008 = vadd.f32 %v1813, %v1944
        %v2009 = vadd.f32 %v1814, %v1945
        %v2010 = vadd.f32 %v1815, %v1946
        %v2011 = vld [vmem:[#allocation6] sm:$0xff]
        %v2012 = vld [vmem:[#allocation6 + $0x8] sm:$0xff]
        %v2013 = vld [vmem:[#allocation6 + $0x10] sm:$0xff]
        %v2014 = vld [vmem:[#allocation6 + $0x18] sm:$0xff]
        %v2015 = vld [vmem:[#allocation6 + $0x20] sm:$0xff]
        %v2016 = vld [vmem:[#allocation6 + $0x28] sm:$0xff]
        %v2017 = vld [vmem:[#allocation6 + $0x30] sm:$0xff]
        %v2018 = vld [vmem:[#allocation6 + $0x38] sm:$0xff]
        %2019 = vmatprep.subr.mxu0 0.0
        %2020 = vmatpush1.msra.mxu0 %v1947
        %2021 = vmatprep.subr.mxu0 0.0
        %2022 = vmatpush1.msra.mxu0 %v1948
        %2023 = vmatprep.subr.mxu0 0.0
        %2024 = vmatpush1.msra.mxu0 %v1949
        %2025 = vmatprep.subr.mxu0 0.0
        %2026 = vmatpush1.msra.mxu0 %v1950
        %2027 = vmatprep.subr.mxu0 0.0
        %2028 = vmatpush1.msra.mxu0 %v1951
        %2029 = vmatprep.subr.mxu0 0.0
        %2030 = vmatpush1.msra.mxu0 %v1952
        %2031 = vmatprep.subr.mxu0 0.0
        %2032 = vmatpush1.msra.mxu0 %v1953
        %2033 = vmatprep.subr.mxu0 0.0
        %2034 = vmatpush1.msra.mxu0 %v1954
        %2035 = vmatprep.subr.mxu0 0.0
        %2036 = vmatpush1.msra.mxu0 %v1955
        %2037 = vmatprep.subr.mxu0 0.0
        %2038 = vmatpush1.msra.mxu0 %v1956
        %2039 = vmatprep.subr.mxu0 0.0
        %2040 = vmatpush1.msra.mxu0 %v1957
        %2041 = vmatprep.subr.mxu0 0.0
        %2042 = vmatpush1.msra.mxu0 %v1958
        %2043 = vmatprep.subr.mxu0 0.0
        %2044 = vmatpush1.msra.mxu0 %v1959
        %2045 = vmatprep.subr.mxu0 0.0
        %2046 = vmatpush1.msra.mxu0 %v1960
        %2047 = vmatprep.subr.mxu0 0.0
        %2048 = vmatpush1.msra.mxu0 %v1961
        %2049 = vmatprep.subr.mxu0 0.0
        %2050 = vmatpush1.msra.mxu0 %v1962
        %2051 = vmatprep.subr.mxu0 0.0
        %2052 = vmatpush1.msra.mxu0 %v1963
        %2053 = vmatprep.subr.mxu0 0.0
        %2054 = vmatpush1.msra.mxu0 %v1964
        %2055 = vmatprep.subr.mxu0 0.0
        %2056 = vmatpush1.msra.mxu0 %v1965
        %2057 = vmatprep.subr.mxu0 0.0
        %2058 = vmatpush1.msra.mxu0 %v1966
        %2059 = vmatprep.subr.mxu0 0.0
        %2060 = vmatpush1.msra.mxu0 %v1967
        %2061 = vmatprep.subr.mxu0 0.0
        %2062 = vmatpush1.msra.mxu0 %v1968
        %2063 = vmatprep.subr.mxu0 0.0
        %2064 = vmatpush1.msra.mxu0 %v1969
        %2065 = vmatprep.subr.mxu0 0.0
        %2066 = vmatpush1.msra.mxu0 %v1970
        %2067 = vmatprep.subr.mxu0 0.0
        %2068 = vmatpush1.msra.mxu0 %v1971
        %2069 = vmatprep.subr.mxu0 0.0
        %2070 = vmatpush1.msra.mxu0 %v1972
        %2071 = vmatprep.subr.mxu0 0.0
        %2072 = vmatpush1.msra.mxu0 %v1973
        %2073 = vmatprep.subr.mxu0 0.0
        %2074 = vmatpush1.msra.mxu0 %v1974
        %2075 = vmatprep.subr.mxu0 0.0
        %2076 = vmatpush1.msra.mxu0 %v1975
        %2077 = vmatprep.subr.mxu0 0.0
        %2078 = vmatpush1.msra.mxu0 %v1976
        %2079 = vmatprep.subr.mxu0 0.0
        %2080 = vmatpush1.msra.mxu0 %v1977
        %2081 = vmatprep.subr.mxu0 0.0
        %2082 = vmatpush1.msra.mxu0 %v1978
        %2083 = vmatprep.mubr.f32.mxu0 %v2012
        %2084 = vmatmul.mubr.f32.gmra.mrb[0].mxu0 %v2011
        %v2085 = vpop.f32.mrb[0].mxu0
        %v2086 = vadd.f32 0.0, %v2085
        %v2087 = vpop.f32.mrb[0].mxu0
        %2088 = vmatprep.mubr.f32.mxu0 %v2016
        %2089 = vmatmul.mubr.f32.gmra.mrb[0].mxu0 %v2015
        %v2090 = vpop.f32.mrb[0].mxu0
        %v2091 = vadd.f32 0.0, %v2090
        %v2092 = vpop.f32.mrb[0].mxu0
        %2093 = vdwg.mxu0
        %2094 = vmatprep.subr.mxu0 0.0
        %2095 = vmatpush1.msra.mxu0 %v1979
        %2096 = vmatprep.subr.mxu0 0.0
        %2097 = vmatpush1.msra.mxu0 %v1980
        %2098 = vmatprep.subr.mxu0 0.0
        %2099 = vmatpush1.msra.mxu0 %v1981
        %2100 = vmatprep.subr.mxu0 0.0
        %2101 = vmatpush1.msra.mxu0 %v1982
        %2102 = vmatprep.subr.mxu0 0.0
        %2103 = vmatpush1.msra.mxu0 %v1983
        %2104 = vmatprep.subr.mxu0 0.0
        %2105 = vmatpush1.msra.mxu0 %v1984
        %2106 = vmatprep.subr.mxu0 0.0
        %2107 = vmatpush1.msra.mxu0 %v1985
        %2108 = vmatprep.subr.mxu0 0.0
        %2109 = vmatpush1.msra.mxu0 %v1986
        %2110 = vmatprep.subr.mxu0 0.0
        %2111 = vmatpush1.msra.mxu0 %v1987
        %2112 = vmatprep.subr.mxu0 0.0
        %2113 = vmatpush1.msra.mxu0 %v1988
        %2114 = vmatprep.subr.mxu0 0.0
        %2115 = vmatpush1.msra.mxu0 %v1989
        %2116 = vmatprep.subr.mxu0 0.0
        %2117 = vmatpush1.msra.mxu0 %v1990
        %2118 = vmatprep.subr.mxu0 0.0
        %2119 = vmatpush1.msra.mxu0 %v1991
        %2120 = vmatprep.subr.mxu0 0.0
        %2121 = vmatpush1.msra.mxu0 %v1992
        %2122 = vmatprep.subr.mxu0 0.0
        %2123 = vmatpush1.msra.mxu0 %v1993
        %2124 = vmatprep.subr.mxu0 0.0
        %2125 = vmatpush1.msra.mxu0 %v1994
        %2126 = vmatprep.subr.mxu0 0.0
        %2127 = vmatpush1.msra.mxu0 %v1995
        %2128 = vmatprep.subr.mxu0 0.0
        %2129 = vmatpush1.msra.mxu0 %v1996
        %2130 = vmatprep.subr.mxu0 0.0
        %2131 = vmatpush1.msra.mxu0 %v1997
        %2132 = vmatprep.subr.mxu0 0.0
        %2133 = vmatpush1.msra.mxu0 %v1998
        %2134 = vmatprep.subr.mxu0 0.0
        %2135 = vmatpush1.msra.mxu0 %v1999
        %2136 = vmatprep.subr.mxu0 0.0
        %2137 = vmatpush1.msra.mxu0 %v2000
        %2138 = vmatprep.subr.mxu0 0.0
        %2139 = vmatpush1.msra.mxu0 %v2001
        %2140 = vmatprep.subr.mxu0 0.0
        %2141 = vmatpush1.msra.mxu0 %v2002
        %2142 = vmatprep.subr.mxu0 0.0
        %2143 = vmatpush1.msra.mxu0 %v2003
        %2144 = vmatprep.subr.mxu0 0.0
        %2145 = vmatpush1.msra.mxu0 %v2004
        %2146 = vmatprep.subr.mxu0 0.0
        %2147 = vmatpush1.msra.mxu0 %v2005
        %2148 = vmatprep.subr.mxu0 0.0
        %2149 = vmatpush1.msra.mxu0 %v2006
        %2150 = vmatprep.subr.mxu0 0.0
        %2151 = vmatpush1.msra.mxu0 %v2007
        %2152 = vmatprep.subr.mxu0 0.0
        %2153 = vmatpush1.msra.mxu0 %v2008
        %2154 = vmatprep.subr.mxu0 0.0
        %2155 = vmatpush1.msra.mxu0 %v2009
        %2156 = vmatprep.subr.mxu0 0.0
        %2157 = vmatpush1.msra.mxu0 %v2010
        %2158 = vmatprep.mubr.f32.mxu0 %v2014
        %2159 = vmatmul.mubr.f32.gmra.mrb[0].mxu0 %v2013
        %v2160 = vpop.f32.mrb[0].mxu0
        %v2161 = vadd.f32 %v2086, %v2160
        %v2162 = vpop.f32.mrb[0].mxu0
        %2163 = vmatprep.mubr.f32.mxu0 %v2018
        %2164 = vmatmul.mubr.f32.gmra.mrb[0].mxu0 %v2017
        %v2165 = vpop.f32.mrb[0].mxu0
        %v2166 = vadd.f32 %v2091, %v2165
        %v2167 = vpop.f32.mrb[0].mxu0
        %2168 = vdwg.mxu0
        %p2169 = scmp.eq.s32.totalorder %s34, 0
        // Predicated region
        $region61: #{tpu_custom_call.1} parent=39 // pred_check
          %p2170 = pneg %p2169
        $region62: #{tpu_custom_call.1} parent=39 // pred_check_branch
          %2172 = sbr.rel (%p2170) target = $region64
        $region63: #{tpu_custom_call.1} parent=39 // pred_region
          %v2173 = vld [vmem:[%s346] sm:$0x1]
          %v2175 = vlaneseq
          %v2176 = vshrl.u32 %v2175, 7
          %v2177 = vsub.s32 0, %v2176
          %v2178 = vrot.slane %v2173, %v2177
          %v2180 = vadd.f32 %v2161, %v2178
          %v2181 = vadd.f32 %v2166, %v2178
          %2182 = vst [vmem:[%s382] sm:$0xff] %v2180
          %2183 = vst [vmem:[%s382 + $0x8] sm:$0xff] %v2181
        $region64: #{tpu_custom_call.1} parent=39 // pred_fallthru
          _
        %p2184 = scmp.ne.s32.totalorder %s34, 0
        // Predicated region
        $region65: #{tpu_custom_call.1} parent=39 // pred_check
          %p2185 = pneg %p2184
        $region66: #{tpu_custom_call.1} parent=39 // pred_check_branch
          %2187 = sbr.rel (%p2185) target = $region68
        $region67: #{tpu_custom_call.1} parent=39 // pred_region
          %v2188 = vld [vmem:[%s382] sm:$0xff]
          %v2189 = vld [vmem:[%s382 + $0x8] sm:$0xff]
          %v2190 = vadd.f32 %v2188, %v2161
          %v2191 = vadd.f32 %v2189, %v2166
          %2192 = vst [vmem:[%s382] sm:$0xff] %v2190
          %2193 = vst [vmem:[%s382 + $0x8] sm:$0xff] %v2191
        $region68: #{tpu_custom_call.1} parent=39 // pred_fallthru
          _
        %s2194 = sand.u32 %s187, 1
        %s2195 = scalar_lea.sflag [#allocation4], %s2194
        %s2196 = sand.u32 %s187, 1
        %s2197 = smul.addr %s2196, 16
        %s2198 = scalar_lea.vmem [#allocation12], %s2197
        // Predicated region
        $region69: #{tpu_custom_call.1} parent=39 // pred_check
          %p2199 = pneg %p197
        $region70: #{tpu_custom_call.1} parent=39 // pred_check_branch
          %2201 = sbr.rel (%p2199) target = $region72
        $region71: #{tpu_custom_call.1} parent=39 // pred_region
          %s2202 = smul.u32 2, %s32
          %s2204 = ssub.s32 256, 256
          %2205 = vsyncadd %s2195, %s2204
          %s2206 = smul.addr %s2202, 2
          %s2207 = sadd.s32 %s33, %s2206
          %s2208 = smul.addr %s2207, 128
          %s2209 = scalar_lea.hbm %s5, %s2208
          %s2210 = sshll.u32 %s2198, 4
          %s2211 = int_to_ptr.vmem [resolvable:$true] %s2210
          %2216 = dma.vmem_to_hbm [thread:$0]  %s2211, 256, %s2209, %s2195, 128, 256, 8
        $region72: #{tpu_custom_call.1} parent=39 // pred_fallthru
          _
      $region40: #{tpu_custom_call.1} parent=5 // pred_fallthru
        _
      %p2217 = scmp.le.s32.totalorder 2, %s22
      // Predicated region
      $region73: #{tpu_custom_call.1} parent=5 // pred_check
        %p2218 = pneg %p2217
      $region74: #{tpu_custom_call.1} parent=5 // pred_check_branch
        %2220 = sbr.rel (%p2218) target = $region76
      $region75: #{tpu_custom_call.1} parent=5 // pred_region
        %s2221 = ssub.s32 %s22, 2
        // Predicated region
        $region77: #{tpu_custom_call.1} parent=75 // pred_check
          %p2222 = pneg %p203
        $region78: #{tpu_custom_call.1} parent=75 // pred_check_branch
          %2224 = sbr.rel (%p2222) target = $region80
        $region79: #{tpu_custom_call.1} parent=75 // pred_region
          %s2225 = sand.u32 %s188, 1
          %s2226 = scalar_lea.sflag [#allocation4], %s2225
          %s2227 = sand.u32 %s188, 1
          %s2228 = smul.addr %s2227, 16
          %s2229 = scalar_lea.vmem [#allocation12], %s2228
          %2230 = dma.done %s2226, 256
        $region80: #{tpu_custom_call.1} parent=75 // pred_fallthru
          _
      $region76: #{tpu_custom_call.1} parent=5 // pred_fallthru
        _
    $region6: #{tpu_custom_call.1} parent=1 // loop_footer
      %s26 = sadd.s32 1, %s22
    $region7: #{tpu_custom_call.1} parent=1 // loop_footer_branch
      %21 = sbr.rel target = $region3
    $region8: #{tpu_custom_call.1} parent=1 // loop_exit
      _
    %2231 = vsyncpa [#allocation3], 1
    %s2232 = scalar_lea.sflag [#allocation3], 1
    %2233 = vsyncpa %s2232, 1
    %2234 = vsyncpa [#allocation8], 1
    %s2235 = scalar_lea.sflag [#allocation8], 1
    %2236 = vsyncpa %s2235, 1
    %2237 = vsyncpa [#allocation11], 1
    %s2238 = scalar_lea.sflag [#allocation11], 1
    %2239 = vsyncpa %s2238, 1
    %2240 = vsyncpa [#allocation4], 1
    %s2241 = scalar_lea.sflag [#allocation4], 1
    %2242 = vsyncpa %s2241, 1
    %2243 = vsyncpa [#allocation5], 1
    %s2244 = scalar_lea.sflag [#allocation5], 1
    %2245 = vsyncpa %s2244, 1

</llo_original>
